<compile_context>
chip_gen: v6e
topology: v6e:2x2x1
jax: 0.10.0
libtpu: 0.0.40
codegen_flags: <defaults>
</compile_context>

<pallas_src>
import jax
import jax.numpy as jnp
from jax.experimental import pallas as pl
from jax.experimental.pallas import tpu as pltpu

INPUT_SIZE = 2
HIDDEN = 128

_SUBLANE = 8          # f32 sublane count
_UNROLL_MAX = 16      # fully unroll the per-chunk time loop up to this length
_FORI_UNROLL = 8      # unroll factor of the rolled fori_loop fallback
_CHUNK_T = 256        # max timesteps per grid chunk (bounds VMEM footprint)


def _make_lstm_kernel(T_total, Tc, Bp, H):
    """Build the per-chunk LSTM recurrence kernel.

    xw_ref   : (Tc, Bp, 4H) f32   precomputed x_t @ W_ih^T + (b_ih + b_hh)
    whh_ref  : (H, 4H)      bf16  W_hh^T, gate order [i, f, o, g]
    out_ref  : (Tc, Bp, H)  f32   h_t per step, time-major
    h_out_ref, c_out_ref : (Bp, H) f32 final hidden / cell state
    h_scr, c_scr         : (Bp, H) f32 VMEM-carried recurrent state
    """
    needs_mask = (T_total % Tc) != 0

    def kernel(xw_ref, whh_ref, out_ref, h_out_ref, c_out_ref, h_scr, c_scr):
        chunk = pl.program_id(0)

        @pl.when(chunk == 0)
        def _():
            h_scr[...] = jnp.zeros_like(h_scr)
            c_scr[...] = jnp.zeros_like(c_scr)

        whh = whh_ref[...]  # (H, 4H) bf16, loaded once per chunk

        def step(t, carry):
            h_prev, c_prev = carry
            # bf16 x bf16 -> f32 accumulate on the MXU.
            gates = xw_ref[t] + jnp.dot(
                h_prev.astype(jnp.bfloat16), whh,
                preferred_element_type=jnp.float32)          # (Bp, 4H) f32
            # Gate order [i, f, o, g]: sigmoid over contiguous (Bp, 3H) via
            # the tanh identity (one EUP op per vreg), tanh over (Bp, H).
            ifo = 0.5 * (jnp.tanh(0.5 * gates[:, : 3 * H]) + 1.0)
            g_g = jnp.tanh(gates[:, 3 * H:])
            i_g = ifo[:, 0 * H:1 * H]
            f_g = ifo[:, 1 * H:2 * H]
            o_g = ifo[:, 2 * H:3 * H]
            c_new = f_g * c_prev + i_g * g_g
            h_new = o_g * jnp.tanh(c_new)
            if needs_mask:
                valid = (chunk * Tc + t) < T_total
                c_new = jnp.where(valid, c_new, c_prev)
                h_new = jnp.where(valid, h_new, h_prev)
            out_ref[t] = h_new.astype(out_ref.dtype)          # full-vreg store
            return (h_new, c_new)

        h = h_scr[...]
        c = c_scr[...]
        if Tc <= _UNROLL_MAX:
            for t in range(Tc):                               # static unroll
                h, c = step(t, (h, c))
        else:
            h, c = jax.lax.fori_loop(0, Tc, step, (h, c),
                                     unroll=_FORI_UNROLL)

        h_scr[...] = h
        c_scr[...] = c
        h_out_ref[...] = h
        c_out_ref[...] = c

    return kernel


def _permute_gates(p, H):
    """Reorder the packed-gate axis from PyTorch [i, f, g, o] to [i, f, o, g]."""
    return jnp.concatenate(
        [p[0 * H:1 * H], p[1 * H:2 * H], p[3 * H:4 * H], p[2 * H:3 * H]], axis=0)


def lstm_encoder(x, w_ih, w_hh, b_ih, b_hh):
    """x: (B, T, I) batch-first (PyTorch convention).

    Returns (encoder_out (B,T,H), (encoder_h (1,B,H), encoder_c (1,B,H))).
    """
    B, T, I = x.shape
    H = w_hh.shape[1]
    assert w_ih.shape == (4 * H, I) and w_hh.shape == (4 * H, H)

    # Pad batch to a multiple of 8 so every vreg sublane / MXU row is used.
    Bp = max(_SUBLANE, ((B + _SUBLANE - 1) // _SUBLANE) * _SUBLANE)

    # Chunk the time axis for the grid.
    Tc = T if T <= _CHUNK_T else _CHUNK_T
    num_chunks = (T + Tc - 1) // Tc
    Tp = num_chunks * Tc

    w_ih_p = _permute_gates(w_ih.astype(jnp.float32), H)            # (4H, I)
    w_hh_p = _permute_gates(w_hh.astype(jnp.float32), H)            # (4H, H)
    bias_p = _permute_gates((b_ih + b_hh).astype(jnp.float32), H)   # (4H,)

    x_tm = jnp.transpose(x.astype(jnp.float32), (1, 0, 2))          # (T, B, I)
    if Tp != T or Bp != B:
        x_tm = jnp.pad(x_tm, ((0, Tp - T), (0, Bp - B), (0, 0)))    # (Tp, Bp, I)

    # Hoisted input projection + bias as rank-1 VPU FMAs (K = I is tiny).
    wihT = w_ih_p.T                                                 # (I, 4H)
    xw = x_tm[..., 0:1] * wihT[0].reshape(1, 1, 4 * H) + bias_p
    for ii in range(1, I):
        xw = xw + x_tm[..., ii:ii + 1] * wihT[ii].reshape(1, 1, 4 * H)
    # xw: (Tp, Bp, 4H) f32

    whh_t = w_hh_p.T.astype(jnp.bfloat16)                           # (H, 4H) bf16

    kernel = _make_lstm_kernel(T, Tc, Bp, H)

    out_tm, h_n, c_n = pl.pallas_call(
        kernel,
        out_shape=(
            jax.ShapeDtypeStruct((Tp, Bp, H), jnp.float32),   # time-major h_t
            jax.ShapeDtypeStruct((Bp, H), jnp.float32),       # final h
            jax.ShapeDtypeStruct((Bp, H), jnp.float32),       # final c
        ),
        grid_spec=pltpu.PrefetchScalarGridSpec(
            num_scalar_prefetch=0,
            grid=(num_chunks,),
            in_specs=[
                pl.BlockSpec((Tc, Bp, 4 * H), lambda c: (c, 0, 0)),
                pl.BlockSpec((H, 4 * H), lambda c: (0, 0)),
            ],
            out_specs=[
                pl.BlockSpec((Tc, Bp, H), lambda c: (c, 0, 0)),
                pl.BlockSpec((Bp, H), lambda c: (0, 0)),
                pl.BlockSpec((Bp, H), lambda c: (0, 0)),
            ],
            scratch_shapes=[
                pltpu.VMEM((Bp, H), jnp.float32),   # h carry
                pltpu.VMEM((Bp, H), jnp.float32),   # c carry
            ],
        ),
        compiler_params=pltpu.CompilerParams(
            dimension_semantics=("arbitrary",)),     # sequential recurrence
    )(xw, whh_t)

    # Drop time/batch padding; convert to batch-first off the critical path.
    encoder_out = jnp.transpose(out_tm[:T, :B], (1, 0, 2))   # (B, T, H)
    encoder_h = h_n[:B][None]                                # (1, B, H)
    encoder_c = c_n[:B][None]                                # (1, B, H)
    return encoder_out, (encoder_h, encoder_c)


lstm_encoder = jax.jit(lstm_encoder)


def _lstm_reference(x, w_ih, w_hh, b_ih, b_hh):
    """Pure-JAX f32 reference (scan, PyTorch gate order) for validation."""
    B, T, I = x.shape
    H = w_hh.shape[1]
    bias = b_ih + b_hh

    def step(carry, x_t):
        h, c = carry
        gates = x_t @ w_ih.T + h @ w_hh.T + bias
        i = jax.nn.sigmoid(gates[:, 0 * H:1 * H])
        f = jax.nn.sigmoid(gates[:, 1 * H:2 * H])
        g = jnp.tanh(gates[:, 2 * H:3 * H])
        o = jax.nn.sigmoid(gates[:, 3 * H:4 * H])
        c_new = f * c + i * g
        h_new = o * jnp.tanh(c_new)
        return (h_new, c_new), h_new

    h0 = jnp.zeros((B, H), jnp.float32)
    c0 = jnp.zeros((B, H), jnp.float32)
    (h_n, c_n), out = jax.lax.scan(step, (h0, c0), jnp.transpose(x, (1, 0, 2)))
    return jnp.transpose(out, (1, 0, 2)), (h_n[None], c_n[None])


if __name__ == "__main__":
    B, T, I, H = 2, 8, INPUT_SIZE, HIDDEN

    key = jax.random.PRNGKey(0)
    k_x, k_wih, k_whh, k_bih, k_bhh = jax.random.split(key, 5)

    # Deterministic parameter init mirroring PyTorch's U(-1/sqrt(H), 1/sqrt(H)).
    bound = 1.0 / jnp.sqrt(jnp.float32(H))
    w_ih = jax.random.uniform(k_wih, (4 * H, I), jnp.float32, -bound, bound)
    w_hh = jax.random.uniform(k_whh, (4 * H, H), jnp.float32, -bound, bound)
    b_ih = jax.random.uniform(k_bih, (4 * H,), jnp.float32, -bound, bound)
    b_hh = jax.random.uniform(k_bhh, (4 * H,), jnp.float32, -bound, bound)

    x = jax.random.normal(k_x, (B, T, I), jnp.float32)

    out, (h_n, c_n) = lstm_encoder(x, w_ih, w_hh, b_ih, b_hh)
    jax.block_until_ready((out, h_n, c_n))

    # Sanity check against pure-JAX f32 reference (bf16 recurrent matmul in
    # the kernel -> loosened tolerance).
    out_ref, (h_ref, c_ref) = _lstm_reference(x, w_ih, w_hh, b_ih, b_hh)
    assert out.shape == (B, T, H) and h_n.shape == (1, B, H) and c_n.shape == (1, B, H)
    assert jnp.allclose(out, out_ref, atol=1e-2, rtol=1e-2)
    assert jnp.allclose(h_n, h_ref, atol=1e-2, rtol=1e-2)
    assert jnp.allclose(c_n, c_ref, atol=1e-2, rtol=1e-2)

    print("KERNEL_OK")
</pallas_src>

<mosaic_0001>
module attributes {stable_mosaic.version = 11 : i64} {
  func.func @kernel(%arg0: i32, %arg1: memref<8x8x512xf32, #tpu.memory_space<vmem>>, %arg2: memref<128x512xbf16, #tpu.memory_space<vmem>>, %arg3: memref<8x8x128xf32, #tpu.memory_space<vmem>>, %arg4: memref<8x128xf32, #tpu.memory_space<vmem>>, %arg5: memref<8x128xf32, #tpu.memory_space<vmem>>, %arg6: memref<8x128xf32, #tpu.memory_space<vmem>>, %arg7: memref<8x128xf32, #tpu.memory_space<vmem>>) attributes {dimension_semantics = [#tpu.dimension_semantics<arbitrary>], iteration_bounds = array<i64: 1>, scalar_prefetch = 0 : i64, scratch_operands = 2 : i64, tpu.core_type = #tpu.core_type<tc>, window_params = [{transform_indices = @transform_0, window_bounds = array<i64: 8, 8, 512>}, {pipeline_mode = #tpu.pipeline_mode<synchronous>, transform_indices = @transform_1, window_bounds = array<i64: 128, 512>}, {transform_indices = @transform_2, window_bounds = array<i64: 8, 8, 128>}, {pipeline_mode = #tpu.pipeline_mode<synchronous>, transform_indices = @transform_3, window_bounds = array<i64: 8, 128>}, {pipeline_mode = #tpu.pipeline_mode<synchronous>, transform_indices = @transform_4, window_bounds = array<i64: 8, 128>}]} {
    %c0_i32 = arith.constant 0 : i32
    %0 = arith.cmpi eq, %arg0, %c0_i32 : i32
    %1 = arith.extui %0 : i1 to i32
    %c0_i32_0 = arith.constant 0 : i32
    %2 = arith.cmpi ne, %1, %c0_i32_0 : i32
    scf.if %2 {
      %cst_86 = arith.constant 0.000000e+00 : f32
      %218 = vector.broadcast %cst_86 : f32 to vector<8x128xf32>
      %c0_87 = arith.constant 0 : index
      %c0_88 = arith.constant 0 : index
      %219 = vector.load %arg6[%c0_87, %c0_88] : memref<8x128xf32, #tpu.memory_space<vmem>>, vector<8x128xf32>
      tpu.vector_store %arg6[%c0_87, %c0_88], %218 {strides = array<i32>} : memref<8x128xf32, #tpu.memory_space<vmem>>, vector<8x128xf32>,
      %cst_89 = arith.constant 0.000000e+00 : f32
      %220 = vector.broadcast %cst_89 : f32 to vector<8x128xf32>
      %c0_90 = arith.constant 0 : index
      %c0_91 = arith.constant 0 : index
      %221 = vector.load %arg7[%c0_90, %c0_91] : memref<8x128xf32, #tpu.memory_space<vmem>>, vector<8x128xf32>
      tpu.vector_store %arg7[%c0_90, %c0_91], %220 {strides = array<i32>} : memref<8x128xf32, #tpu.memory_space<vmem>>, vector<8x128xf32>,
    } else {
    }
    %c0 = arith.constant 0 : index
    %c0_1 = arith.constant 0 : index
    %3 = vector.load %arg2[%c0, %c0_1] : memref<128x512xbf16, #tpu.memory_space<vmem>>, vector<128x512xbf16>
    %c0_2 = arith.constant 0 : index
    %c0_3 = arith.constant 0 : index
    %4 = vector.load %arg6[%c0_2, %c0_3] : memref<8x128xf32, #tpu.memory_space<vmem>>, vector<8x128xf32>
    %c0_4 = arith.constant 0 : index
    %c0_5 = arith.constant 0 : index
    %5 = vector.load %arg7[%c0_4, %c0_5] : memref<8x128xf32, #tpu.memory_space<vmem>>, vector<8x128xf32>
    %c0_6 = arith.constant 0 : index
    %c0_7 = arith.constant 0 : index
    %c0_8 = arith.constant 0 : index
    %6 = vector.load %arg1[%c0_6, %c0_7, %c0_8] : memref<8x8x512xf32, #tpu.memory_space<vmem>>, vector<1x8x512xf32>
    %7 = vector.shape_cast %6 : vector<1x8x512xf32> to vector<8x512xf32>
    %8 = arith.truncf %4 : vector<8x128xf32> to vector<8x128xbf16>
    %cst = arith.constant dense<0.000000e+00> : vector<8x512xf32>
    %9 = tpu.matmul %8, %3, %cst {dimension_numbers = #tpu.dot_dimension_numbers<[1], [0], [0], [1], [0, 0, 1, 1], [], []>} : vector<8x128xbf16>, vector<128x512xbf16>, vector<8x512xf32> -> vector<8x512xf32>
    %10 = arith.addf %7, %9 : vector<8x512xf32>
    %11 = vector.extract_strided_slice %10 {offsets = [0, 0], sizes = [8, 384], strides = [1, 1]} : vector<8x512xf32> to vector<8x384xf32>
    %cst_9 = arith.constant 5.000000e-01 : f32
    %12 = vector.broadcast %cst_9 : f32 to vector<8x384xf32>
    %13 = arith.mulf %12, %11 : vector<8x384xf32>
    %14 = math.tanh %13 : vector<8x384xf32>
    %cst_10 = arith.constant 1.000000e+00 : f32
    %15 = vector.broadcast %cst_10 : f32 to vector<8x384xf32>
    %16 = arith.addf %14, %15 : vector<8x384xf32>
    %cst_11 = arith.constant 5.000000e-01 : f32
    %17 = vector.broadcast %cst_11 : f32 to vector<8x384xf32>
    %18 = arith.mulf %17, %16 : vector<8x384xf32>
    %19 = vector.extract_strided_slice %10 {offsets = [0, 384], sizes = [8, 128], strides = [1, 1]} : vector<8x512xf32> to vector<8x128xf32>
    %20 = math.tanh %19 : vector<8x128xf32>
    %21 = vector.extract_strided_slice %18 {offsets = [0, 0], sizes = [8, 128], strides = [1, 1]} : vector<8x384xf32> to vector<8x128xf32>
    %22 = vector.extract_strided_slice %18 {offsets = [0, 128], sizes = [8, 128], strides = [1, 1]} : vector<8x384xf32> to vector<8x128xf32>
    %23 = vector.extract_strided_slice %18 {offsets = [0, 256], sizes = [8, 128], strides = [1, 1]} : vector<8x384xf32> to vector<8x128xf32>
    %24 = arith.mulf %22, %5 : vector<8x128xf32>
    %25 = arith.mulf %21, %20 : vector<8x128xf32>
    %26 = arith.addf %24, %25 : vector<8x128xf32>
    %27 = math.tanh %26 : vector<8x128xf32>
    %28 = arith.mulf %23, %27 : vector<8x128xf32>
    %c0_12 = arith.constant 0 : index
    %c0_13 = arith.constant 0 : index
    %c0_14 = arith.constant 0 : index
    %29 = vector.load %arg3[%c0_12, %c0_13, %c0_14] : memref<8x8x128xf32, #tpu.memory_space<vmem>>, vector<1x8x128xf32>
    %30 = vector.shape_cast %29 : vector<1x8x128xf32> to vector<8x128xf32>
    %31 = vector.shape_cast %28 : vector<8x128xf32> to vector<1x8x128xf32>
    tpu.vector_store %arg3[%c0_12, %c0_13, %c0_14], %31 {strides = array<i32>} : memref<8x8x128xf32, #tpu.memory_space<vmem>>, vector<1x8x128xf32>,
    %c1 = arith.constant 1 : index
    %c0_15 = arith.constant 0 : index
    %c0_16 = arith.constant 0 : index
    %32 = vector.load %arg1[%c1, %c0_15, %c0_16] : memref<8x8x512xf32, #tpu.memory_space<vmem>>, vector<1x8x512xf32>
    %33 = vector.shape_cast %32 : vector<1x8x512xf32> to vector<8x512xf32>
    %34 = arith.truncf %28 : vector<8x128xf32> to vector<8x128xbf16>
    %cst_17 = arith.constant dense<0.000000e+00> : vector<8x512xf32>
    %35 = tpu.matmul %34, %3, %cst_17 {dimension_numbers = #tpu.dot_dimension_numbers<[1], [0], [0], [1], [0, 0, 1, 1], [], []>} : vector<8x128xbf16>, vector<128x512xbf16>, vector<8x512xf32> -> vector<8x512xf32>
    %36 = arith.addf %33, %35 : vector<8x512xf32>
    %37 = vector.extract_strided_slice %36 {offsets = [0, 0], sizes = [8, 384], strides = [1, 1]} : vector<8x512xf32> to vector<8x384xf32>
    %cst_18 = arith.constant 5.000000e-01 : f32
    %38 = vector.broadcast %cst_18 : f32 to vector<8x384xf32>
    %39 = arith.mulf %38, %37 : vector<8x384xf32>
    %40 = math.tanh %39 : vector<8x384xf32>
    %cst_19 = arith.constant 1.000000e+00 : f32
    %41 = vector.broadcast %cst_19 : f32 to vector<8x384xf32>
    %42 = arith.addf %40, %41 : vector<8x384xf32>
    %cst_20 = arith.constant 5.000000e-01 : f32
    %43 = vector.broadcast %cst_20 : f32 to vector<8x384xf32>
    %44 = arith.mulf %43, %42 : vector<8x384xf32>
    %45 = vector.extract_strided_slice %36 {offsets = [0, 384], sizes = [8, 128], strides = [1, 1]} : vector<8x512xf32> to vector<8x128xf32>
    %46 = math.tanh %45 : vector<8x128xf32>
    %47 = vector.extract_strided_slice %44 {offsets = [0, 0], sizes = [8, 128], strides = [1, 1]} : vector<8x384xf32> to vector<8x128xf32>
    %48 = vector.extract_strided_slice %44 {offsets = [0, 128], sizes = [8, 128], strides = [1, 1]} : vector<8x384xf32> to vector<8x128xf32>
    %49 = vector.extract_strided_slice %44 {offsets = [0, 256], sizes = [8, 128], strides = [1, 1]} : vector<8x384xf32> to vector<8x128xf32>
    %50 = arith.mulf %48, %26 : vector<8x128xf32>
    %51 = arith.mulf %47, %46 : vector<8x128xf32>
    %52 = arith.addf %50, %51 : vector<8x128xf32>
    %53 = math.tanh %52 : vector<8x128xf32>
    %54 = arith.mulf %49, %53 : vector<8x128xf32>
    %c1_21 = arith.constant 1 : index
    %c0_22 = arith.constant 0 : index
    %c0_23 = arith.constant 0 : index
    %55 = vector.load %arg3[%c1_21, %c0_22, %c0_23] : memref<8x8x128xf32, #tpu.memory_space<vmem>>, vector<1x8x128xf32>
    %56 = vector.shape_cast %55 : vector<1x8x128xf32> to vector<8x128xf32>
    %57 = vector.shape_cast %54 : vector<8x128xf32> to vector<1x8x128xf32>
    tpu.vector_store %arg3[%c1_21, %c0_22, %c0_23], %57 {strides = array<i32>} : memref<8x8x128xf32, #tpu.memory_space<vmem>>, vector<1x8x128xf32>,
    %c2 = arith.constant 2 : index
    %c0_24 = arith.constant 0 : index
    %c0_25 = arith.constant 0 : index
    %58 = vector.load %arg1[%c2, %c0_24, %c0_25] : memref<8x8x512xf32, #tpu.memory_space<vmem>>, vector<1x8x512xf32>
    %59 = vector.shape_cast %58 : vector<1x8x512xf32> to vector<8x512xf32>
    %60 = arith.truncf %54 : vector<8x128xf32> to vector<8x128xbf16>
    %cst_26 = arith.constant dense<0.000000e+00> : vector<8x512xf32>
    %61 = tpu.matmul %60, %3, %cst_26 {dimension_numbers = #tpu.dot_dimension_numbers<[1], [0], [0], [1], [0, 0, 1, 1], [], []>} : vector<8x128xbf16>, vector<128x512xbf16>, vector<8x512xf32> -> vector<8x512xf32>
    %62 = arith.addf %59, %61 : vector<8x512xf32>
    %63 = vector.extract_strided_slice %62 {offsets = [0, 0], sizes = [8, 384], strides = [1, 1]} : vector<8x512xf32> to vector<8x384xf32>
    %cst_27 = arith.constant 5.000000e-01 : f32
    %64 = vector.broadcast %cst_27 : f32 to vector<8x384xf32>
    %65 = arith.mulf %64, %63 : vector<8x384xf32>
    %66 = math.tanh %65 : vector<8x384xf32>
    %cst_28 = arith.constant 1.000000e+00 : f32
    %67 = vector.broadcast %cst_28 : f32 to vector<8x384xf32>
    %68 = arith.addf %66, %67 : vector<8x384xf32>
    %cst_29 = arith.constant 5.000000e-01 : f32
    %69 = vector.broadcast %cst_29 : f32 to vector<8x384xf32>
    %70 = arith.mulf %69, %68 : vector<8x384xf32>
    %71 = vector.extract_strided_slice %62 {offsets = [0, 384], sizes = [8, 128], strides = [1, 1]} : vector<8x512xf32> to vector<8x128xf32>
    %72 = math.tanh %71 : vector<8x128xf32>
    %73 = vector.extract_strided_slice %70 {offsets = [0, 0], sizes = [8, 128], strides = [1, 1]} : vector<8x384xf32> to vector<8x128xf32>
    %74 = vector.extract_strided_slice %70 {offsets = [0, 128], sizes = [8, 128], strides = [1, 1]} : vector<8x384xf32> to vector<8x128xf32>
    %75 = vector.extract_strided_slice %70 {offsets = [0, 256], sizes = [8, 128], strides = [1, 1]} : vector<8x384xf32> to vector<8x128xf32>
    %76 = arith.mulf %74, %52 : vector<8x128xf32>
    %77 = arith.mulf %73, %72 : vector<8x128xf32>
    %78 = arith.addf %76, %77 : vector<8x128xf32>
    %79 = math.tanh %78 : vector<8x128xf32>
    %80 = arith.mulf %75, %79 : vector<8x128xf32>
    %c2_30 = arith.constant 2 : index
    %c0_31 = arith.constant 0 : index
    %c0_32 = arith.constant 0 : index
    %81 = vector.load %arg3[%c2_30, %c0_31, %c0_32] : memref<8x8x128xf32, #tpu.memory_space<vmem>>, vector<1x8x128xf32>
    %82 = vector.shape_cast %81 : vector<1x8x128xf32> to vector<8x128xf32>
    %83 = vector.shape_cast %80 : vector<8x128xf32> to vector<1x8x128xf32>
    tpu.vector_store %arg3[%c2_30, %c0_31, %c0_32], %83 {strides = array<i32>} : memref<8x8x128xf32, #tpu.memory_space<vmem>>, vector<1x8x128xf32>,
    %c3 = arith.constant 3 : index
    %c0_33 = arith.constant 0 : index
    %c0_34 = arith.constant 0 : index
    %84 = vector.load %arg1[%c3, %c0_33, %c0_34] : memref<8x8x512xf32, #tpu.memory_space<vmem>>, vector<1x8x512xf32>
    %85 = vector.shape_cast %84 : vector<1x8x512xf32> to vector<8x512xf32>
    %86 = arith.truncf %80 : vector<8x128xf32> to vector<8x128xbf16>
    %cst_35 = arith.constant dense<0.000000e+00> : vector<8x512xf32>
    %87 = tpu.matmul %86, %3, %cst_35 {dimension_numbers = #tpu.dot_dimension_numbers<[1], [0], [0], [1], [0, 0, 1, 1], [], []>} : vector<8x128xbf16>, vector<128x512xbf16>, vector<8x512xf32> -> vector<8x512xf32>
    %88 = arith.addf %85, %87 : vector<8x512xf32>
    %89 = vector.extract_strided_slice %88 {offsets = [0, 0], sizes = [8, 384], strides = [1, 1]} : vector<8x512xf32> to vector<8x384xf32>
    %cst_36 = arith.constant 5.000000e-01 : f32
    %90 = vector.broadcast %cst_36 : f32 to vector<8x384xf32>
    %91 = arith.mulf %90, %89 : vector<8x384xf32>
    %92 = math.tanh %91 : vector<8x384xf32>
    %cst_37 = arith.constant 1.000000e+00 : f32
    %93 = vector.broadcast %cst_37 : f32 to vector<8x384xf32>
    %94 = arith.addf %92, %93 : vector<8x384xf32>
    %cst_38 = arith.constant 5.000000e-01 : f32
    %95 = vector.broadcast %cst_38 : f32 to vector<8x384xf32>
    %96 = arith.mulf %95, %94 : vector<8x384xf32>
    %97 = vector.extract_strided_slice %88 {offsets = [0, 384], sizes = [8, 128], strides = [1, 1]} : vector<8x512xf32> to vector<8x128xf32>
    %98 = math.tanh %97 : vector<8x128xf32>
    %99 = vector.extract_strided_slice %96 {offsets = [0, 0], sizes = [8, 128], strides = [1, 1]} : vector<8x384xf32> to vector<8x128xf32>
    %100 = vector.extract_strided_slice %96 {offsets = [0, 128], sizes = [8, 128], strides = [1, 1]} : vector<8x384xf32> to vector<8x128xf32>
    %101 = vector.extract_strided_slice %96 {offsets = [0, 256], sizes = [8, 128], strides = [1, 1]} : vector<8x384xf32> to vector<8x128xf32>
    %102 = arith.mulf %100, %78 : vector<8x128xf32>
    %103 = arith.mulf %99, %98 : vector<8x128xf32>
    %104 = arith.addf %102, %103 : vector<8x128xf32>
    %105 = math.tanh %104 : vector<8x128xf32>
    %106 = arith.mulf %101, %105 : vector<8x128xf32>
    %c3_39 = arith.constant 3 : index
    %c0_40 = arith.constant 0 : index
    %c0_41 = arith.constant 0 : index
    %107 = vector.load %arg3[%c3_39, %c0_40, %c0_41] : memref<8x8x128xf32, #tpu.memory_space<vmem>>, vector<1x8x128xf32>
    %108 = vector.shape_cast %107 : vector<1x8x128xf32> to vector<8x128xf32>
    %109 = vector.shape_cast %106 : vector<8x128xf32> to vector<1x8x128xf32>
    tpu.vector_store %arg3[%c3_39, %c0_40, %c0_41], %109 {strides = array<i32>} : memref<8x8x128xf32, #tpu.memory_space<vmem>>, vector<1x8x128xf32>,
    %c4 = arith.constant 4 : index
    %c0_42 = arith.constant 0 : index
    %c0_43 = arith.constant 0 : index
    %110 = vector.load %arg1[%c4, %c0_42, %c0_43] : memref<8x8x512xf32, #tpu.memory_space<vmem>>, vector<1x8x512xf32>
    %111 = vector.shape_cast %110 : vector<1x8x512xf32> to vector<8x512xf32>
    %112 = arith.truncf %106 : vector<8x128xf32> to vector<8x128xbf16>
    %cst_44 = arith.constant dense<0.000000e+00> : vector<8x512xf32>
    %113 = tpu.matmul %112, %3, %cst_44 {dimension_numbers = #tpu.dot_dimension_numbers<[1], [0], [0], [1], [0, 0, 1, 1], [], []>} : vector<8x128xbf16>, vector<128x512xbf16>, vector<8x512xf32> -> vector<8x512xf32>
    %114 = arith.addf %111, %113 : vector<8x512xf32>
    %115 = vector.extract_strided_slice %114 {offsets = [0, 0], sizes = [8, 384], strides = [1, 1]} : vector<8x512xf32> to vector<8x384xf32>
    %cst_45 = arith.constant 5.000000e-01 : f32
    %116 = vector.broadcast %cst_45 : f32 to vector<8x384xf32>
    %117 = arith.mulf %116, %115 : vector<8x384xf32>
    %118 = math.tanh %117 : vector<8x384xf32>
    %cst_46 = arith.constant 1.000000e+00 : f32
    %119 = vector.broadcast %cst_46 : f32 to vector<8x384xf32>
    %120 = arith.addf %118, %119 : vector<8x384xf32>
    %cst_47 = arith.constant 5.000000e-01 : f32
    %121 = vector.broadcast %cst_47 : f32 to vector<8x384xf32>
    %122 = arith.mulf %121, %120 : vector<8x384xf32>
    %123 = vector.extract_strided_slice %114 {offsets = [0, 384], sizes = [8, 128], strides = [1, 1]} : vector<8x512xf32> to vector<8x128xf32>
    %124 = math.tanh %123 : vector<8x128xf32>
    %125 = vector.extract_strided_slice %122 {offsets = [0, 0], sizes = [8, 128], strides = [1, 1]} : vector<8x384xf32> to vector<8x128xf32>
    %126 = vector.extract_strided_slice %122 {offsets = [0, 128], sizes = [8, 128], strides = [1, 1]} : vector<8x384xf32> to vector<8x128xf32>
    %127 = vector.extract_strided_slice %122 {offsets = [0, 256], sizes = [8, 128], strides = [1, 1]} : vector<8x384xf32> to vector<8x128xf32>
    %128 = arith.mulf %126, %104 : vector<8x128xf32>
    %129 = arith.mulf %125, %124 : vector<8x128xf32>
    %130 = arith.addf %128, %129 : vector<8x128xf32>
    %131 = math.tanh %130 : vector<8x128xf32>
    %132 = arith.mulf %127, %131 : vector<8x128xf32>
    %c4_48 = arith.constant 4 : index
    %c0_49 = arith.constant 0 : index
    %c0_50 = arith.constant 0 : index
    %133 = vector.load %arg3[%c4_48, %c0_49, %c0_50] : memref<8x8x128xf32, #tpu.memory_space<vmem>>, vector<1x8x128xf32>
    %134 = vector.shape_cast %133 : vector<1x8x128xf32> to vector<8x128xf32>
    %135 = vector.shape_cast %132 : vector<8x128xf32> to vector<1x8x128xf32>
    tpu.vector_store %arg3[%c4_48, %c0_49, %c0_50], %135 {strides = array<i32>} : memref<8x8x128xf32, #tpu.memory_space<vmem>>, vector<1x8x128xf32>,
    %c5 = arith.constant 5 : index
    %c0_51 = arith.constant 0 : index
    %c0_52 = arith.constant 0 : index
    %136 = vector.load %arg1[%c5, %c0_51, %c0_52] : memref<8x8x512xf32, #tpu.memory_space<vmem>>, vector<1x8x512xf32>
    %137 = vector.shape_cast %136 : vector<1x8x512xf32> to vector<8x512xf32>
    %138 = arith.truncf %132 : vector<8x128xf32> to vector<8x128xbf16>
    %cst_53 = arith.constant dense<0.000000e+00> : vector<8x512xf32>
    %139 = tpu.matmul %138, %3, %cst_53 {dimension_numbers = #tpu.dot_dimension_numbers<[1], [0], [0], [1], [0, 0, 1, 1], [], []>} : vector<8x128xbf16>, vector<128x512xbf16>, vector<8x512xf32> -> vector<8x512xf32>
    %140 = arith.addf %137, %139 : vector<8x512xf32>
    %141 = vector.extract_strided_slice %140 {offsets = [0, 0], sizes = [8, 384], strides = [1, 1]} : vector<8x512xf32> to vector<8x384xf32>
    %cst_54 = arith.constant 5.000000e-01 : f32
    %142 = vector.broadcast %cst_54 : f32 to vector<8x384xf32>
    %143 = arith.mulf %142, %141 : vector<8x384xf32>
    %144 = math.tanh %143 : vector<8x384xf32>
    %cst_55 = arith.constant 1.000000e+00 : f32
    %145 = vector.broadcast %cst_55 : f32 to vector<8x384xf32>
    %146 = arith.addf %144, %145 : vector<8x384xf32>
    %cst_56 = arith.constant 5.000000e-01 : f32
    %147 = vector.broadcast %cst_56 : f32 to vector<8x384xf32>
    %148 = arith.mulf %147, %146 : vector<8x384xf32>
    %149 = vector.extract_strided_slice %140 {offsets = [0, 384], sizes = [8, 128], strides = [1, 1]} : vector<8x512xf32> to vector<8x128xf32>
    %150 = math.tanh %149 : vector<8x128xf32>
    %151 = vector.extract_strided_slice %148 {offsets = [0, 0], sizes = [8, 128], strides = [1, 1]} : vector<8x384xf32> to vector<8x128xf32>
    %152 = vector.extract_strided_slice %148 {offsets = [0, 128], sizes = [8, 128], strides = [1, 1]} : vector<8x384xf32> to vector<8x128xf32>
    %153 = vector.extract_strided_slice %148 {offsets = [0, 256], sizes = [8, 128], strides = [1, 1]} : vector<8x384xf32> to vector<8x128xf32>
    %154 = arith.mulf %152, %130 : vector<8x128xf32>
    %155 = arith.mulf %151, %150 : vector<8x128xf32>
    %156 = arith.addf %154, %155 : vector<8x128xf32>
    %157 = math.tanh %156 : vector<8x128xf32>
    %158 = arith.mulf %153, %157 : vector<8x128xf32>
    %c5_57 = arith.constant 5 : index
    %c0_58 = arith.constant 0 : index
    %c0_59 = arith.constant 0 : index
    %159 = vector.load %arg3[%c5_57, %c0_58, %c0_59] : memref<8x8x128xf32, #tpu.memory_space<vmem>>, vector<1x8x128xf32>
    %160 = vector.shape_cast %159 : vector<1x8x128xf32> to vector<8x128xf32>
    %161 = vector.shape_cast %158 : vector<8x128xf32> to vector<1x8x128xf32>
    tpu.vector_store %arg3[%c5_57, %c0_58, %c0_59], %161 {strides = array<i32>} : memref<8x8x128xf32, #tpu.memory_space<vmem>>, vector<1x8x128xf32>,
    %c6 = arith.constant 6 : index
    %c0_60 = arith.constant 0 : index
    %c0_61 = arith.constant 0 : index
    %162 = vector.load %arg1[%c6, %c0_60, %c0_61] : memref<8x8x512xf32, #tpu.memory_space<vmem>>, vector<1x8x512xf32>
    %163 = vector.shape_cast %162 : vector<1x8x512xf32> to vector<8x512xf32>
    %164 = arith.truncf %158 : vector<8x128xf32> to vector<8x128xbf16>
    %cst_62 = arith.constant dense<0.000000e+00> : vector<8x512xf32>
    %165 = tpu.matmul %164, %3, %cst_62 {dimension_numbers = #tpu.dot_dimension_numbers<[1], [0], [0], [1], [0, 0, 1, 1], [], []>} : vector<8x128xbf16>, vector<128x512xbf16>, vector<8x512xf32> -> vector<8x512xf32>
    %166 = arith.addf %163, %165 : vector<8x512xf32>
    %167 = vector.extract_strided_slice %166 {offsets = [0, 0], sizes = [8, 384], strides = [1, 1]} : vector<8x512xf32> to vector<8x384xf32>
    %cst_63 = arith.constant 5.000000e-01 : f32
    %168 = vector.broadcast %cst_63 : f32 to vector<8x384xf32>
    %169 = arith.mulf %168, %167 : vector<8x384xf32>
    %170 = math.tanh %169 : vector<8x384xf32>
    %cst_64 = arith.constant 1.000000e+00 : f32
    %171 = vector.broadcast %cst_64 : f32 to vector<8x384xf32>
    %172 = arith.addf %170, %171 : vector<8x384xf32>
    %cst_65 = arith.constant 5.000000e-01 : f32
    %173 = vector.broadcast %cst_65 : f32 to vector<8x384xf32>
    %174 = arith.mulf %173, %172 : vector<8x384xf32>
    %175 = vector.extract_strided_slice %166 {offsets = [0, 384], sizes = [8, 128], strides = [1, 1]} : vector<8x512xf32> to vector<8x128xf32>
    %176 = math.tanh %175 : vector<8x128xf32>
    %177 = vector.extract_strided_slice %174 {offsets = [0, 0], sizes = [8, 128], strides = [1, 1]} : vector<8x384xf32> to vector<8x128xf32>
    %178 = vector.extract_strided_slice %174 {offsets = [0, 128], sizes = [8, 128], strides = [1, 1]} : vector<8x384xf32> to vector<8x128xf32>
    %179 = vector.extract_strided_slice %174 {offsets = [0, 256], sizes = [8, 128], strides = [1, 1]} : vector<8x384xf32> to vector<8x128xf32>
    %180 = arith.mulf %178, %156 : vector<8x128xf32>
    %181 = arith.mulf %177, %176 : vector<8x128xf32>
    %182 = arith.addf %180, %181 : vector<8x128xf32>
    %183 = math.tanh %182 : vector<8x128xf32>
    %184 = arith.mulf %179, %183 : vector<8x128xf32>
    %c6_66 = arith.constant 6 : index
    %c0_67 = arith.constant 0 : index
    %c0_68 = arith.constant 0 : index
    %185 = vector.load %arg3[%c6_66, %c0_67, %c0_68] : memref<8x8x128xf32, #tpu.memory_space<vmem>>, vector<1x8x128xf32>
    %186 = vector.shape_cast %185 : vector<1x8x128xf32> to vector<8x128xf32>
    %187 = vector.shape_cast %184 : vector<8x128xf32> to vector<1x8x128xf32>
    tpu.vector_store %arg3[%c6_66, %c0_67, %c0_68], %187 {strides = array<i32>} : memref<8x8x128xf32, #tpu.memory_space<vmem>>, vector<1x8x128xf32>,
    %c7 = arith.constant 7 : index
    %c0_69 = arith.constant 0 : index
    %c0_70 = arith.constant 0 : index
    %188 = vector.load %arg1[%c7, %c0_69, %c0_70] : memref<8x8x512xf32, #tpu.memory_space<vmem>>, vector<1x8x512xf32>
    %189 = vector.shape_cast %188 : vector<1x8x512xf32> to vector<8x512xf32>
    %190 = arith.truncf %184 : vector<8x128xf32> to vector<8x128xbf16>
    %cst_71 = arith.constant dense<0.000000e+00> : vector<8x512xf32>
    %191 = tpu.matmul %190, %3, %cst_71 {dimension_numbers = #tpu.dot_dimension_numbers<[1], [0], [0], [1], [0, 0, 1, 1], [], []>} : vector<8x128xbf16>, vector<128x512xbf16>, vector<8x512xf32> -> vector<8x512xf32>
    %192 = arith.addf %189, %191 : vector<8x512xf32>
    %193 = vector.extract_strided_slice %192 {offsets = [0, 0], sizes = [8, 384], strides = [1, 1]} : vector<8x512xf32> to vector<8x384xf32>
    %cst_72 = arith.constant 5.000000e-01 : f32
    %194 = vector.broadcast %cst_72 : f32 to vector<8x384xf32>
    %195 = arith.mulf %194, %193 : vector<8x384xf32>
    %196 = math.tanh %195 : vector<8x384xf32>
    %cst_73 = arith.constant 1.000000e+00 : f32
    %197 = vector.broadcast %cst_73 : f32 to vector<8x384xf32>
    %198 = arith.addf %196, %197 : vector<8x384xf32>
    %cst_74 = arith.constant 5.000000e-01 : f32
    %199 = vector.broadcast %cst_74 : f32 to vector<8x384xf32>
    %200 = arith.mulf %199, %198 : vector<8x384xf32>
    %201 = vector.extract_strided_slice %192 {offsets = [0, 384], sizes = [8, 128], strides = [1, 1]} : vector<8x512xf32> to vector<8x128xf32>
    %202 = math.tanh %201 : vector<8x128xf32>
    %203 = vector.extract_strided_slice %200 {offsets = [0, 0], sizes = [8, 128], strides = [1, 1]} : vector<8x384xf32> to vector<8x128xf32>
    %204 = vector.extract_strided_slice %200 {offsets = [0, 128], sizes = [8, 128], strides = [1, 1]} : vector<8x384xf32> to vector<8x128xf32>
    %205 = vector.extract_strided_slice %200 {offsets = [0, 256], sizes = [8, 128], strides = [1, 1]} : vector<8x384xf32> to vector<8x128xf32>
    %206 = arith.mulf %204, %182 : vector<8x128xf32>
    %207 = arith.mulf %203, %202 : vector<8x128xf32>
    %208 = arith.addf %206, %207 : vector<8x128xf32>
    %209 = math.tanh %208 : vector<8x128xf32>
    %210 = arith.mulf %205, %209 : vector<8x128xf32>
    %c7_75 = arith.constant 7 : index
    %c0_76 = arith.constant 0 : index
    %c0_77 = arith.constant 0 : index
    %211 = vector.load %arg3[%c7_75, %c0_76, %c0_77] : memref<8x8x128xf32, #tpu.memory_space<vmem>>, vector<1x8x128xf32>
    %212 = vector.shape_cast %211 : vector<1x8x128xf32> to vector<8x128xf32>
    %213 = vector.shape_cast %210 : vector<8x128xf32> to vector<1x8x128xf32>
    tpu.vector_store %arg3[%c7_75, %c0_76, %c0_77], %213 {strides = array<i32>} : memref<8x8x128xf32, #tpu.memory_space<vmem>>, vector<1x8x128xf32>,
    %c0_78 = arith.constant 0 : index
    %c0_79 = arith.constant 0 : index
    %214 = vector.load %arg6[%c0_78, %c0_79] : memref<8x128xf32, #tpu.memory_space<vmem>>, vector<8x128xf32>
    tpu.vector_store %arg6[%c0_78, %c0_79], %210 {strides = array<i32>} : memref<8x128xf32, #tpu.memory_space<vmem>>, vector<8x128xf32>,
    %c0_80 = arith.constant 0 : index
    %c0_81 = arith.constant 0 : index
    %215 = vector.load %arg7[%c0_80, %c0_81] : memref<8x128xf32, #tpu.memory_space<vmem>>, vector<8x128xf32>
    tpu.vector_store %arg7[%c0_80, %c0_81], %208 {strides = array<i32>} : memref<8x128xf32, #tpu.memory_space<vmem>>, vector<8x128xf32>,
    %c0_82 = arith.constant 0 : index
    %c0_83 = arith.constant 0 : index
    %216 = vector.load %arg4[%c0_82, %c0_83] : memref<8x128xf32, #tpu.memory_space<vmem>>, vector<8x128xf32>
    tpu.vector_store %arg4[%c0_82, %c0_83], %210 {strides = array<i32>} : memref<8x128xf32, #tpu.memory_space<vmem>>, vector<8x128xf32>,
    %c0_84 = arith.constant 0 : index
    %c0_85 = arith.constant 0 : index
    %217 = vector.load %arg5[%c0_84, %c0_85] : memref<8x128xf32, #tpu.memory_space<vmem>>, vector<8x128xf32>
    tpu.vector_store %arg5[%c0_84, %c0_85], %208 {strides = array<i32>} : memref<8x128xf32, #tpu.memory_space<vmem>>, vector<8x128xf32>,
    return
  }
  func.func @transform_0(%arg0: i32) -> (i32, i32, i32) {
    %c0_i32 = arith.constant 0 : i32
    %c0_i32_0 = arith.constant 0 : i32
    %c0_i32_1 = arith.constant 0 : i32
    return %arg0, %c0_i32, %c0_i32_0 : i32, i32, i32
  }
  func.func @transform_1(%arg0: i32) -> (i32, i32) {
    %c0_i32 = arith.constant 0 : i32
    %c0_i32_0 = arith.constant 0 : i32
    %c0_i32_1 = arith.constant 0 : i32
    return %c0_i32, %c0_i32_0 : i32, i32
  }
  func.func @transform_2(%arg0: i32) -> (i32, i32, i32) {
    %c0_i32 = arith.constant 0 : i32
    %c0_i32_0 = arith.constant 0 : i32
    %c0_i32_1 = arith.constant 0 : i32
    return %arg0, %c0_i32, %c0_i32_0 : i32, i32, i32
  }
  func.func @transform_3(%arg0: i32) -> (i32, i32) {
    %c0_i32 = arith.constant 0 : i32
    %c0_i32_0 = arith.constant 0 : i32
    %c0_i32_1 = arith.constant 0 : i32
    return %c0_i32, %c0_i32_0 : i32, i32
  }
  func.func @transform_4(%arg0: i32) -> (i32, i32) {
    %c0_i32 = arith.constant 0 : i32
    %c0_i32_0 = arith.constant 0 : i32
    %c0_i32_1 = arith.constant 0 : i32
    return %c0_i32, %c0_i32_0 : i32, i32
  }
}

</mosaic_0001>

<llo_original>
// kernel: lstm_encoder.1
$region0: #{lstm_encoder.1}
  #allocation0 [shape = 'u32[]', space=smem, size = 0x4, offset = 0x4, fixed_abs, tag = 'smem constant byte address 0x4 - core index']
  #allocation1 [shape = 'u32[144,128]{1,0:T(1,128)}', space=vmem, size = 0x12000, scoped, tag = 'internal scratch']
  #allocation2 [shape = 'f32[8,128]{1,0:T(8,128)}', space=vmem, size = 0x1000, scoped, tag = 'scratch operand']
  #allocation3 [shape = 'f32[8,128]{1,0:T(8,128)}', space=vmem, size = 0x1000, scoped, tag = 'scratch operand']
  %s0 = inlined_call_operand.vmem [shape: f32[8,8,512], index: 0, kind: input, shape index: {}]
  %s1 = inlined_call_operand.vmem [shape: bf16[128,512], index: 1, kind: input, shape index: {}]
  %s2 = inlined_call_operand.vmem [shape: f32[8,8,128], index: 2, kind: output, shape index: {0}]
  %s3 = inlined_call_operand.vmem [shape: f32[8,128], index: 3, kind: output, shape index: {1}]
  %s4 = inlined_call_operand.vmem [shape: f32[8,128], index: 4, kind: output, shape index: {2}]
  %5 = xla_tuple %s2, %s3, %s4
  %s6 = sld [smem:[#allocation0]]
  $region38: #{lstm_encoder.1} parent=0
    _
  %s8 = ssub.s32 1, %s6
  %s9 = scalar_select 0, %s8, %s6
  // Predicated region
  $region2: #{lstm_encoder.1} parent=0 // pred_check
    _
  $region3: #{lstm_encoder.1} parent=0 // pred_check_branch
    %11 = sbr.rel (0) target = $region5
  $region4: #{lstm_encoder.1} parent=0 // pred_region
    _
  $region5: #{lstm_encoder.1} parent=0 // pred_fallthru
    _
  // Predicated region
  $region6: #{lstm_encoder.1} parent=0 // pred_check
    _
  $region7: #{lstm_encoder.1} parent=0 // pred_check_branch
    %13 = sbr.rel (0) target = $region9
  $region8: #{lstm_encoder.1} parent=0 // pred_region
    _
  $region9: #{lstm_encoder.1} parent=0 // pred_fallthru
    _
  %p15 = scmp.eq.s32.totalorder 0, 0
  // Predicated region
  $region10: #{lstm_encoder.1} parent=0 // pred_check
    %p16 = pneg %p15
  $region11: #{lstm_encoder.1} parent=0 // pred_check_branch
    %18 = sbr.rel (%p16) target = $region13
  $region12: #{lstm_encoder.1} parent=0 // pred_region
    %19 = vst [vmem:[#allocation2] sm:$0xff] 0.0
    %20 = vst [vmem:[#allocation3] sm:$0xff] 0.0
  $region13: #{lstm_encoder.1} parent=0 // pred_fallthru
    _
  %v21 = vld [vmem:[%s1] sm:$0xff]
  %v22 = vld [vmem:[%s1 + $0x8] sm:$0xff]
  %v23 = vld [vmem:[%s1 + $0x10] sm:$0xff]
  %v24 = vld [vmem:[%s1 + $0x18] sm:$0xff]
  %v25 = vld [vmem:[%s1 + $0x20] sm:$0xff]
  %v26 = vld [vmem:[%s1 + $0x28] sm:$0xff]
  %v27 = vld [vmem:[%s1 + $0x30] sm:$0xff]
  %v28 = vld [vmem:[%s1 + $0x38] sm:$0xff]
  %v29 = vld [vmem:[%s1 + $0x40] sm:$0xff]
  %v30 = vld [vmem:[%s1 + $0x48] sm:$0xff]
  %v31 = vld [vmem:[%s1 + $0x50] sm:$0xff]
  %v32 = vld [vmem:[%s1 + $0x58] sm:$0xff]
  %v33 = vld [vmem:[%s1 + $0x60] sm:$0xff]
  %v34 = vld [vmem:[%s1 + $0x68] sm:$0xff]
  %v35 = vld [vmem:[%s1 + $0x70] sm:$0xff]
  %v36 = vld [vmem:[%s1 + $0x78] sm:$0xff]
  %v37 = vld [vmem:[%s1 + $0x80] sm:$0xff]
  %v38 = vld [vmem:[%s1 + $0x88] sm:$0xff]
  %v39 = vld [vmem:[%s1 + $0x90] sm:$0xff]
  %v40 = vld [vmem:[%s1 + $0x98] sm:$0xff]
  %v41 = vld [vmem:[%s1 + $0xa0] sm:$0xff]
  %v42 = vld [vmem:[%s1 + $0xa8] sm:$0xff]
  %v43 = vld [vmem:[%s1 + $0xb0] sm:$0xff]
  %v44 = vld [vmem:[%s1 + $0xb8] sm:$0xff]
  %v45 = vld [vmem:[%s1 + $0xc0] sm:$0xff]
  %v46 = vld [vmem:[%s1 + $0xc8] sm:$0xff]
  %v47 = vld [vmem:[%s1 + $0xd0] sm:$0xff]
  %v48 = vld [vmem:[%s1 + $0xd8] sm:$0xff]
  %v49 = vld [vmem:[%s1 + $0xe0] sm:$0xff]
  %v50 = vld [vmem:[%s1 + $0xe8] sm:$0xff]
  %v51 = vld [vmem:[%s1 + $0xf0] sm:$0xff]
  %v52 = vld [vmem:[%s1 + $0xf8] sm:$0xff]
  %v53 = vld [vmem:[#allocation2] sm:$0xff]
  %v54 = vld [vmem:[#allocation3] sm:$0xff]
  %v55 = vld [vmem:[%s0] sm:$0xff]
  %v56 = vld [vmem:[%s0 + $0x8] sm:$0xff]
  %v57 = vld [vmem:[%s0 + $0x10] sm:$0xff]
  %v58 = vld [vmem:[%s0 + $0x18] sm:$0xff]
  %v59 = vpack.c.bf16 %v53, %v53
  %v92 = vunpack.c.l.b16 %v21
  %v93 = vunpack.c.h.b16 %v21
  %v94 = vunpack.c.l.b16 %v22
  %v95 = vunpack.c.h.b16 %v22
  %v96 = vunpack.c.l.b16 %v23
  %v97 = vunpack.c.h.b16 %v23
  %v98 = vunpack.c.l.b16 %v24
  %v99 = vunpack.c.h.b16 %v24
  %v100 = vunpack.c.l.b16 %v25
  %v101 = vunpack.c.h.b16 %v25
  %v102 = vunpack.c.l.b16 %v26
  %v103 = vunpack.c.h.b16 %v26
  %v104 = vunpack.c.l.b16 %v27
  %v105 = vunpack.c.h.b16 %v27
  %v106 = vunpack.c.l.b16 %v28
  %v107 = vunpack.c.h.b16 %v28
  %v108 = vunpack.c.l.b16 %v29
  %v109 = vunpack.c.h.b16 %v29
  %v110 = vunpack.c.l.b16 %v30
  %v111 = vunpack.c.h.b16 %v30
  %v112 = vunpack.c.l.b16 %v31
  %v113 = vunpack.c.h.b16 %v31
  %v114 = vunpack.c.l.b16 %v32
  %v115 = vunpack.c.h.b16 %v32
  %v116 = vunpack.c.l.b16 %v33
  %v117 = vunpack.c.h.b16 %v33
  %v118 = vunpack.c.l.b16 %v34
  %v119 = vunpack.c.h.b16 %v34
  %v120 = vunpack.c.l.b16 %v35
  %v121 = vunpack.c.h.b16 %v35
  %v122 = vunpack.c.l.b16 %v36
  %v123 = vunpack.c.h.b16 %v36
  %v124 = vunpack.c.l.b16 %v37
  %v125 = vunpack.c.h.b16 %v37
  %v126 = vunpack.c.l.b16 %v38
  %v127 = vunpack.c.h.b16 %v38
  %v128 = vunpack.c.l.b16 %v39
  %v129 = vunpack.c.h.b16 %v39
  %v130 = vunpack.c.l.b16 %v40
  %v131 = vunpack.c.h.b16 %v40
  %v132 = vunpack.c.l.b16 %v41
  %v133 = vunpack.c.h.b16 %v41
  %v134 = vunpack.c.l.b16 %v42
  %v135 = vunpack.c.h.b16 %v42
  %v136 = vunpack.c.l.b16 %v43
  %v137 = vunpack.c.h.b16 %v43
  %v138 = vunpack.c.l.b16 %v44
  %v139 = vunpack.c.h.b16 %v44
  %v140 = vunpack.c.l.b16 %v45
  %v141 = vunpack.c.h.b16 %v45
  %v142 = vunpack.c.l.b16 %v46
  %v143 = vunpack.c.h.b16 %v46
  %v144 = vunpack.c.l.b16 %v47
  %v145 = vunpack.c.h.b16 %v47
  %v146 = vunpack.c.l.b16 %v48
  %v147 = vunpack.c.h.b16 %v48
  %v148 = vunpack.c.l.b16 %v49
  %v149 = vunpack.c.h.b16 %v49
  %v150 = vunpack.c.l.b16 %v50
  %v151 = vunpack.c.h.b16 %v50
  %v152 = vunpack.c.l.b16 %v51
  %v153 = vunpack.c.h.b16 %v51
  %v154 = vunpack.c.l.b16 %v52
  %v155 = vunpack.c.h.b16 %v52
  %v156 = vpack.c.b16 %v96, %v92
  %v157 = vpack.c.b16 %v97, %v93
  %v158 = vpack.c.b16 %v98, %v94
  %v159 = vpack.c.b16 %v99, %v95
  %v160 = vpack.c.b16 %v104, %v100
  %v161 = vpack.c.b16 %v105, %v101
  %v162 = vpack.c.b16 %v106, %v102
  %v163 = vpack.c.b16 %v107, %v103
  %v164 = vpack.c.b16 %v112, %v108
  %v165 = vpack.c.b16 %v113, %v109
  %v166 = vpack.c.b16 %v114, %v110
  %v167 = vpack.c.b16 %v115, %v111
  %v168 = vpack.c.b16 %v120, %v116
  %v169 = vpack.c.b16 %v121, %v117
  %v170 = vpack.c.b16 %v122, %v118
  %v171 = vpack.c.b16 %v123, %v119
  %v172 = vpack.c.b16 %v128, %v124
  %v173 = vpack.c.b16 %v129, %v125
  %v174 = vpack.c.b16 %v130, %v126
  %v175 = vpack.c.b16 %v131, %v127
  %v176 = vpack.c.b16 %v136, %v132
  %v177 = vpack.c.b16 %v137, %v133
  %v178 = vpack.c.b16 %v138, %v134
  %v179 = vpack.c.b16 %v139, %v135
  %v180 = vpack.c.b16 %v144, %v140
  %v181 = vpack.c.b16 %v145, %v141
  %v182 = vpack.c.b16 %v146, %v142
  %v183 = vpack.c.b16 %v147, %v143
  %v184 = vpack.c.b16 %v152, %v148
  %v185 = vpack.c.b16 %v153, %v149
  %v186 = vpack.c.b16 %v154, %v150
  %v187 = vpack.c.b16 %v155, %v151
  %220 = vmatprep.subr.bf16.mxu0 %v185
  %221 = vmatpush1.bf16.msra.mxu0 %v184
  %222 = vmatprep.subr.bf16.mxu0 %v181
  %223 = vmatpush1.bf16.msra.mxu0 %v180
  %224 = vmatprep.subr.bf16.mxu0 %v177
  %225 = vmatpush1.bf16.msra.mxu0 %v176
  %226 = vmatprep.subr.bf16.mxu0 %v173
  %227 = vmatpush1.bf16.msra.mxu0 %v172
  %228 = vmatprep.subr.bf16.mxu0 %v169
  %229 = vmatpush1.bf16.msra.mxu0 %v168
  %230 = vmatprep.subr.bf16.mxu0 %v165
  %231 = vmatpush1.bf16.msra.mxu0 %v164
  %232 = vmatprep.subr.bf16.mxu0 %v161
  %233 = vmatpush1.bf16.msra.mxu0 %v160
  %234 = vmatprep.subr.bf16.mxu0 %v157
  %235 = vmatpush1.bf16.msra.mxu0 %v156
  %236 = vmatprep.subr.bf16.mxu0 0
  %237 = vmatpush2.bf16.msra.mxu0 0
  %238 = vmatprep.subr.bf16.mxu0 0
  %239 = vmatpush2.bf16.msra.mxu0 0
  %240 = vmatprep.subr.bf16.mxu0 0
  %241 = vmatpush2.bf16.msra.mxu0 0
  %242 = vmatprep.subr.bf16.mxu0 0
  %243 = vmatpush2.bf16.msra.mxu0 0
  %244 = vmatprep.subr.bf16.mxu0 0
  %245 = vmatpush2.bf16.msra.mxu0 0
  %246 = vmatprep.subr.bf16.mxu0 0
  %247 = vmatpush2.bf16.msra.mxu0 0
  %248 = vmatprep.subr.bf16.mxu0 0
  %249 = vmatpush2.bf16.msra.mxu0 0
  %250 = vmatprep.subr.bf16.mxu0 0
  %251 = vmatpush2.bf16.msra.mxu0 0
  %252 = vmatprep.mubr.bf16.mxu0 0
  %253 = vmatmul.mubr.bf16.gmra.mxu0 %v59
  %v254 = vpop.f32.mrf.mxu0
  %v255 = vadd.f32 0.0, %v254
  %v256 = vpop.f32.mrf.mxu0
  %v257 = vadd.f32 0.0, %v256
  %v258 = vpop.f32.mrf.mxu0
  %v259 = vpop.f32.mrf.mxu0
  %260 = vdwg.mxu0
  %261 = vmatprep.subr.bf16.mxu0 %v187
  %262 = vmatpush1.bf16.msra.mxu0 %v186
  %263 = vmatprep.subr.bf16.mxu0 %v183
  %264 = vmatpush1.bf16.msra.mxu0 %v182
  %265 = vmatprep.subr.bf16.mxu0 %v179
  %266 = vmatpush1.bf16.msra.mxu0 %v178
  %267 = vmatprep.subr.bf16.mxu0 %v175
  %268 = vmatpush1.bf16.msra.mxu0 %v174
  %269 = vmatprep.subr.bf16.mxu0 %v171
  %270 = vmatpush1.bf16.msra.mxu0 %v170
  %271 = vmatprep.subr.bf16.mxu0 %v167
  %272 = vmatpush1.bf16.msra.mxu0 %v166
  %273 = vmatprep.subr.bf16.mxu0 %v163
  %274 = vmatpush1.bf16.msra.mxu0 %v162
  %275 = vmatprep.subr.bf16.mxu0 %v159
  %276 = vmatpush1.bf16.msra.mxu0 %v158
  %277 = vmatprep.subr.bf16.mxu0 0
  %278 = vmatpush2.bf16.msra.mxu0 0
  %279 = vmatprep.subr.bf16.mxu0 0
  %280 = vmatpush2.bf16.msra.mxu0 0
  %281 = vmatprep.subr.bf16.mxu0 0
  %282 = vmatpush2.bf16.msra.mxu0 0
  %283 = vmatprep.subr.bf16.mxu0 0
  %284 = vmatpush2.bf16.msra.mxu0 0
  %285 = vmatprep.subr.bf16.mxu0 0
  %286 = vmatpush2.bf16.msra.mxu0 0
  %287 = vmatprep.subr.bf16.mxu0 0
  %288 = vmatpush2.bf16.msra.mxu0 0
  %289 = vmatprep.subr.bf16.mxu0 0
  %290 = vmatpush2.bf16.msra.mxu0 0
  %291 = vmatprep.subr.bf16.mxu0 0
  %292 = vmatpush2.bf16.msra.mxu0 0
  %293 = vmatprep.mubr.bf16.mxu0 0
  %294 = vmatmul.mubr.bf16.gmra.mxu0 %v59
  %v295 = vpop.f32.mrf.mxu0
  %v296 = vadd.f32 0.0, %v295
  %v297 = vpop.f32.mrf.mxu0
  %v298 = vadd.f32 0.0, %v297
  %v299 = vpop.f32.mrf.mxu0
  %v300 = vpop.f32.mrf.mxu0
  %301 = vdwg.mxu0
  %v302 = vadd.f32 %v55, %v255
  %v303 = vadd.f32 %v56, %v257
  %v304 = vadd.f32 %v57, %v296
  %v305 = vadd.f32 %v58, %v298
  %v306 = vmul.f32 %v302, 0.5
  %v307 = vmul.f32 %v303, 0.5
  %v308 = vmul.f32 %v304, 0.5
  %v309 = vtanh.pop %v306
  %v310 = vtanh.pop %v307
  %v311 = vtanh.pop %v308
  %v312 = vadd.f32 %v309, 1.0
  %v313 = vadd.f32 %v310, 1.0
  %v314 = vadd.f32 %v311, 1.0
  %v315 = vmul.f32 %v312, 0.5
  %v316 = vmul.f32 %v313, 0.5
  %v317 = vmul.f32 %v314, 0.5
  %v318 = vtanh.pop %v305
  %v319 = vmul.f32 %v316, %v54
  %v320 = vmul.f32 %v315, %v318
  %v321 = vadd.f32 %v319, %v320
  %v322 = vtanh.pop %v321
  %v323 = vmul.f32 %v317, %v322
  %324 = vst [vmem:[%s2] sm:$0xff] %v323
  %s325 = scalar_lea.vmem %s0, 32
  %v326 = vld [vmem:[%s325] sm:$0xff]
  %v327 = vld [vmem:[%s325 + $0x8] sm:$0xff]
  %v328 = vld [vmem:[%s325 + $0x10] sm:$0xff]
  %v329 = vld [vmem:[%s325 + $0x18] sm:$0xff]
  %v330 = vpack.c.bf16 %v323, %v323
  %331 = vmatprep.subr.bf16.mxu0 %v185
  %332 = vmatpush1.bf16.msra.mxu0 %v184
  %333 = vmatprep.subr.bf16.mxu0 %v181
  %334 = vmatpush1.bf16.msra.mxu0 %v180
  %335 = vmatprep.subr.bf16.mxu0 %v177
  %336 = vmatpush1.bf16.msra.mxu0 %v176
  %337 = vmatprep.subr.bf16.mxu0 %v173
  %338 = vmatpush1.bf16.msra.mxu0 %v172
  %339 = vmatprep.subr.bf16.mxu0 %v169
  %340 = vmatpush1.bf16.msra.mxu0 %v168
  %341 = vmatprep.subr.bf16.mxu0 %v165
  %342 = vmatpush1.bf16.msra.mxu0 %v164
  %343 = vmatprep.subr.bf16.mxu0 %v161
  %344 = vmatpush1.bf16.msra.mxu0 %v160
  %345 = vmatprep.subr.bf16.mxu0 %v157
  %346 = vmatpush1.bf16.msra.mxu0 %v156
  %347 = vmatprep.subr.bf16.mxu0 0
  %348 = vmatpush2.bf16.msra.mxu0 0
  %349 = vmatprep.subr.bf16.mxu0 0
  %350 = vmatpush2.bf16.msra.mxu0 0
  %351 = vmatprep.subr.bf16.mxu0 0
  %352 = vmatpush2.bf16.msra.mxu0 0
  %353 = vmatprep.subr.bf16.mxu0 0
  %354 = vmatpush2.bf16.msra.mxu0 0
  %355 = vmatprep.subr.bf16.mxu0 0
  %356 = vmatpush2.bf16.msra.mxu0 0
  %357 = vmatprep.subr.bf16.mxu0 0
  %358 = vmatpush2.bf16.msra.mxu0 0
  %359 = vmatprep.subr.bf16.mxu0 0
  %360 = vmatpush2.bf16.msra.mxu0 0
  %361 = vmatprep.subr.bf16.mxu0 0
  %362 = vmatpush2.bf16.msra.mxu0 0
  %363 = vmatprep.mubr.bf16.mxu0 0
  %364 = vmatmul.mubr.bf16.gmra.mxu0 %v330
  %v365 = vpop.f32.mrf.mxu0
  %v366 = vadd.f32 0.0, %v365
  %v367 = vpop.f32.mrf.mxu0
  %v368 = vadd.f32 0.0, %v367
  %v369 = vpop.f32.mrf.mxu0
  %v370 = vpop.f32.mrf.mxu0
  %371 = vdwg.mxu0
  %372 = vmatprep.subr.bf16.mxu0 %v187
  %373 = vmatpush1.bf16.msra.mxu0 %v186
  %374 = vmatprep.subr.bf16.mxu0 %v183
  %375 = vmatpush1.bf16.msra.mxu0 %v182
  %376 = vmatprep.subr.bf16.mxu0 %v179
  %377 = vmatpush1.bf16.msra.mxu0 %v178
  %378 = vmatprep.subr.bf16.mxu0 %v175
  %379 = vmatpush1.bf16.msra.mxu0 %v174
  %380 = vmatprep.subr.bf16.mxu0 %v171
  %381 = vmatpush1.bf16.msra.mxu0 %v170
  %382 = vmatprep.subr.bf16.mxu0 %v167
  %383 = vmatpush1.bf16.msra.mxu0 %v166
  %384 = vmatprep.subr.bf16.mxu0 %v163
  %385 = vmatpush1.bf16.msra.mxu0 %v162
  %386 = vmatprep.subr.bf16.mxu0 %v159
  %387 = vmatpush1.bf16.msra.mxu0 %v158
  %388 = vmatprep.subr.bf16.mxu0 0
  %389 = vmatpush2.bf16.msra.mxu0 0
  %390 = vmatprep.subr.bf16.mxu0 0
  %391 = vmatpush2.bf16.msra.mxu0 0
  %392 = vmatprep.subr.bf16.mxu0 0
  %393 = vmatpush2.bf16.msra.mxu0 0
  %394 = vmatprep.subr.bf16.mxu0 0
  %395 = vmatpush2.bf16.msra.mxu0 0
  %396 = vmatprep.subr.bf16.mxu0 0
  %397 = vmatpush2.bf16.msra.mxu0 0
  %398 = vmatprep.subr.bf16.mxu0 0
  %399 = vmatpush2.bf16.msra.mxu0 0
  %400 = vmatprep.subr.bf16.mxu0 0
  %401 = vmatpush2.bf16.msra.mxu0 0
  %402 = vmatprep.subr.bf16.mxu0 0
  %403 = vmatpush2.bf16.msra.mxu0 0
  %404 = vmatprep.mubr.bf16.mxu0 0
  %405 = vmatmul.mubr.bf16.gmra.mxu0 %v330
  %v406 = vpop.f32.mrf.mxu0
  %v407 = vadd.f32 0.0, %v406
  %v408 = vpop.f32.mrf.mxu0
  %v409 = vadd.f32 0.0, %v408
  %v410 = vpop.f32.mrf.mxu0
  %v411 = vpop.f32.mrf.mxu0
  %412 = vdwg.mxu0
  %v413 = vadd.f32 %v326, %v366
  %v414 = vadd.f32 %v327, %v368
  %v415 = vadd.f32 %v328, %v407
  %v416 = vadd.f32 %v329, %v409
  %v417 = vmul.f32 %v413, 0.5
  %v418 = vmul.f32 %v414, 0.5
  %v419 = vmul.f32 %v415, 0.5
  %v420 = vtanh.pop %v417
  %v421 = vtanh.pop %v418
  %v422 = vtanh.pop %v419
  %v423 = vadd.f32 %v420, 1.0
  %v424 = vadd.f32 %v421, 1.0
  %v425 = vadd.f32 %v422, 1.0
  %v426 = vmul.f32 %v423, 0.5
  %v427 = vmul.f32 %v424, 0.5
  %v428 = vmul.f32 %v425, 0.5
  %v429 = vtanh.pop %v416
  %v430 = vmul.f32 %v427, %v321
  %v431 = vmul.f32 %v426, %v429
  %v432 = vadd.f32 %v430, %v431
  %v433 = vtanh.pop %v432
  %v434 = vmul.f32 %v428, %v433
  %s435 = scalar_lea.vmem %s2, 8
  %436 = vst [vmem:[%s435] sm:$0xff] %v434
  %s437 = scalar_lea.vmem %s0, 64
  %v438 = vld [vmem:[%s437] sm:$0xff]
  %v439 = vld [vmem:[%s437 + $0x8] sm:$0xff]
  %v440 = vld [vmem:[%s437 + $0x10] sm:$0xff]
  %v441 = vld [vmem:[%s437 + $0x18] sm:$0xff]
  %v442 = vpack.c.bf16 %v434, %v434
  %443 = vmatprep.subr.bf16.mxu0 %v185
  %444 = vmatpush1.bf16.msra.mxu0 %v184
  %445 = vmatprep.subr.bf16.mxu0 %v181
  %446 = vmatpush1.bf16.msra.mxu0 %v180
  %447 = vmatprep.subr.bf16.mxu0 %v177
  %448 = vmatpush1.bf16.msra.mxu0 %v176
  %449 = vmatprep.subr.bf16.mxu0 %v173
  %450 = vmatpush1.bf16.msra.mxu0 %v172
  %451 = vmatprep.subr.bf16.mxu0 %v169
  %452 = vmatpush1.bf16.msra.mxu0 %v168
  %453 = vmatprep.subr.bf16.mxu0 %v165
  %454 = vmatpush1.bf16.msra.mxu0 %v164
  %455 = vmatprep.subr.bf16.mxu0 %v161
  %456 = vmatpush1.bf16.msra.mxu0 %v160
  %457 = vmatprep.subr.bf16.mxu0 %v157
  %458 = vmatpush1.bf16.msra.mxu0 %v156
  %459 = vmatprep.subr.bf16.mxu0 0
  %460 = vmatpush2.bf16.msra.mxu0 0
  %461 = vmatprep.subr.bf16.mxu0 0
  %462 = vmatpush2.bf16.msra.mxu0 0
  %463 = vmatprep.subr.bf16.mxu0 0
  %464 = vmatpush2.bf16.msra.mxu0 0
  %465 = vmatprep.subr.bf16.mxu0 0
  %466 = vmatpush2.bf16.msra.mxu0 0
  %467 = vmatprep.subr.bf16.mxu0 0
  %468 = vmatpush2.bf16.msra.mxu0 0
  %469 = vmatprep.subr.bf16.mxu0 0
  %470 = vmatpush2.bf16.msra.mxu0 0
  %471 = vmatprep.subr.bf16.mxu0 0
  %472 = vmatpush2.bf16.msra.mxu0 0
  %473 = vmatprep.subr.bf16.mxu0 0
  %474 = vmatpush2.bf16.msra.mxu0 0
  %475 = vmatprep.mubr.bf16.mxu0 0
  %476 = vmatmul.mubr.bf16.gmra.mxu0 %v442
  %v477 = vpop.f32.mrf.mxu0
  %v478 = vadd.f32 0.0, %v477
  %v479 = vpop.f32.mrf.mxu0
  %v480 = vadd.f32 0.0, %v479
  %v481 = vpop.f32.mrf.mxu0
  %v482 = vpop.f32.mrf.mxu0
  %483 = vdwg.mxu0
  %484 = vmatprep.subr.bf16.mxu0 %v187
  %485 = vmatpush1.bf16.msra.mxu0 %v186
  %486 = vmatprep.subr.bf16.mxu0 %v183
  %487 = vmatpush1.bf16.msra.mxu0 %v182
  %488 = vmatprep.subr.bf16.mxu0 %v179
  %489 = vmatpush1.bf16.msra.mxu0 %v178
  %490 = vmatprep.subr.bf16.mxu0 %v175
  %491 = vmatpush1.bf16.msra.mxu0 %v174
  %492 = vmatprep.subr.bf16.mxu0 %v171
  %493 = vmatpush1.bf16.msra.mxu0 %v170
  %494 = vmatprep.subr.bf16.mxu0 %v167
  %495 = vmatpush1.bf16.msra.mxu0 %v166
  %496 = vmatprep.subr.bf16.mxu0 %v163
  %497 = vmatpush1.bf16.msra.mxu0 %v162
  %498 = vmatprep.subr.bf16.mxu0 %v159
  %499 = vmatpush1.bf16.msra.mxu0 %v158
  %500 = vmatprep.subr.bf16.mxu0 0
  %501 = vmatpush2.bf16.msra.mxu0 0
  %502 = vmatprep.subr.bf16.mxu0 0
  %503 = vmatpush2.bf16.msra.mxu0 0
  %504 = vmatprep.subr.bf16.mxu0 0
  %505 = vmatpush2.bf16.msra.mxu0 0
  %506 = vmatprep.subr.bf16.mxu0 0
  %507 = vmatpush2.bf16.msra.mxu0 0
  %508 = vmatprep.subr.bf16.mxu0 0
  %509 = vmatpush2.bf16.msra.mxu0 0
  %510 = vmatprep.subr.bf16.mxu0 0
  %511 = vmatpush2.bf16.msra.mxu0 0
  %512 = vmatprep.subr.bf16.mxu0 0
  %513 = vmatpush2.bf16.msra.mxu0 0
  %514 = vmatprep.subr.bf16.mxu0 0
  %515 = vmatpush2.bf16.msra.mxu0 0
  %516 = vmatprep.mubr.bf16.mxu0 0
  %517 = vmatmul.mubr.bf16.gmra.mxu0 %v442
  %v518 = vpop.f32.mrf.mxu0
  %v519 = vadd.f32 0.0, %v518
  %v520 = vpop.f32.mrf.mxu0
  %v521 = vadd.f32 0.0, %v520
  %v522 = vpop.f32.mrf.mxu0
  %v523 = vpop.f32.mrf.mxu0
  %524 = vdwg.mxu0
  %v525 = vadd.f32 %v438, %v478
  %v526 = vadd.f32 %v439, %v480
  %v527 = vadd.f32 %v440, %v519
  %v528 = vadd.f32 %v441, %v521
  %v529 = vmul.f32 %v525, 0.5
  %v530 = vmul.f32 %v526, 0.5
  %v531 = vmul.f32 %v527, 0.5
  %v532 = vtanh.pop %v529
  %v533 = vtanh.pop %v530
  %v534 = vtanh.pop %v531
  %v535 = vadd.f32 %v532, 1.0
  %v536 = vadd.f32 %v533, 1.0
  %v537 = vadd.f32 %v534, 1.0
  %v538 = vmul.f32 %v535, 0.5
  %v539 = vmul.f32 %v536, 0.5
  %v540 = vmul.f32 %v537, 0.5
  %v541 = vtanh.pop %v528
  %v542 = vmul.f32 %v539, %v432
  %v543 = vmul.f32 %v538, %v541
  %v544 = vadd.f32 %v542, %v543
  %v545 = vtanh.pop %v544
  %v546 = vmul.f32 %v540, %v545
  %s547 = scalar_lea.vmem %s2, 16
  %548 = vst [vmem:[%s547] sm:$0xff] %v546
  %s549 = scalar_lea.vmem %s0, 96
  %v550 = vld [vmem:[%s549] sm:$0xff]
  %v551 = vld [vmem:[%s549 + $0x8] sm:$0xff]
  %v552 = vld [vmem:[%s549 + $0x10] sm:$0xff]
  %v553 = vld [vmem:[%s549 + $0x18] sm:$0xff]
  %v554 = vpack.c.bf16 %v546, %v546
  %555 = vmatprep.subr.bf16.mxu0 %v185
  %556 = vmatpush1.bf16.msra.mxu0 %v184
  %557 = vmatprep.subr.bf16.mxu0 %v181
  %558 = vmatpush1.bf16.msra.mxu0 %v180
  %559 = vmatprep.subr.bf16.mxu0 %v177
  %560 = vmatpush1.bf16.msra.mxu0 %v176
  %561 = vmatprep.subr.bf16.mxu0 %v173
  %562 = vmatpush1.bf16.msra.mxu0 %v172
  %563 = vmatprep.subr.bf16.mxu0 %v169
  %564 = vmatpush1.bf16.msra.mxu0 %v168
  %565 = vmatprep.subr.bf16.mxu0 %v165
  %566 = vmatpush1.bf16.msra.mxu0 %v164
  %567 = vmatprep.subr.bf16.mxu0 %v161
  %568 = vmatpush1.bf16.msra.mxu0 %v160
  %569 = vmatprep.subr.bf16.mxu0 %v157
  %570 = vmatpush1.bf16.msra.mxu0 %v156
  %571 = vmatprep.subr.bf16.mxu0 0
  %572 = vmatpush2.bf16.msra.mxu0 0
  %573 = vmatprep.subr.bf16.mxu0 0
  %574 = vmatpush2.bf16.msra.mxu0 0
  %575 = vmatprep.subr.bf16.mxu0 0
  %576 = vmatpush2.bf16.msra.mxu0 0
  %577 = vmatprep.subr.bf16.mxu0 0
  %578 = vmatpush2.bf16.msra.mxu0 0
  %579 = vmatprep.subr.bf16.mxu0 0
  %580 = vmatpush2.bf16.msra.mxu0 0
  %581 = vmatprep.subr.bf16.mxu0 0
  %582 = vmatpush2.bf16.msra.mxu0 0
  %583 = vmatprep.subr.bf16.mxu0 0
  %584 = vmatpush2.bf16.msra.mxu0 0
  %585 = vmatprep.subr.bf16.mxu0 0
  %586 = vmatpush2.bf16.msra.mxu0 0
  %587 = vmatprep.mubr.bf16.mxu0 0
  %588 = vmatmul.mubr.bf16.gmra.mxu0 %v554
  %v589 = vpop.f32.mrf.mxu0
  %v590 = vadd.f32 0.0, %v589
  %v591 = vpop.f32.mrf.mxu0
  %v592 = vadd.f32 0.0, %v591
  %v593 = vpop.f32.mrf.mxu0
  %v594 = vpop.f32.mrf.mxu0
  %595 = vdwg.mxu0
  %596 = vmatprep.subr.bf16.mxu0 %v187
  %597 = vmatpush1.bf16.msra.mxu0 %v186
  %598 = vmatprep.subr.bf16.mxu0 %v183
  %599 = vmatpush1.bf16.msra.mxu0 %v182
  %600 = vmatprep.subr.bf16.mxu0 %v179
  %601 = vmatpush1.bf16.msra.mxu0 %v178
  %602 = vmatprep.subr.bf16.mxu0 %v175
  %603 = vmatpush1.bf16.msra.mxu0 %v174
  %604 = vmatprep.subr.bf16.mxu0 %v171
  %605 = vmatpush1.bf16.msra.mxu0 %v170
  %606 = vmatprep.subr.bf16.mxu0 %v167
  %607 = vmatpush1.bf16.msra.mxu0 %v166
  %608 = vmatprep.subr.bf16.mxu0 %v163
  %609 = vmatpush1.bf16.msra.mxu0 %v162
  %610 = vmatprep.subr.bf16.mxu0 %v159
  %611 = vmatpush1.bf16.msra.mxu0 %v158
  %612 = vmatprep.subr.bf16.mxu0 0
  %613 = vmatpush2.bf16.msra.mxu0 0
  %614 = vmatprep.subr.bf16.mxu0 0
  %615 = vmatpush2.bf16.msra.mxu0 0
  %616 = vmatprep.subr.bf16.mxu0 0
  %617 = vmatpush2.bf16.msra.mxu0 0
  %618 = vmatprep.subr.bf16.mxu0 0
  %619 = vmatpush2.bf16.msra.mxu0 0
  %620 = vmatprep.subr.bf16.mxu0 0
  %621 = vmatpush2.bf16.msra.mxu0 0
  %622 = vmatprep.subr.bf16.mxu0 0
  %623 = vmatpush2.bf16.msra.mxu0 0
  %624 = vmatprep.subr.bf16.mxu0 0
  %625 = vmatpush2.bf16.msra.mxu0 0
  %626 = vmatprep.subr.bf16.mxu0 0
  %627 = vmatpush2.bf16.msra.mxu0 0
  %628 = vmatprep.mubr.bf16.mxu0 0
  %629 = vmatmul.mubr.bf16.gmra.mxu0 %v554
  %v630 = vpop.f32.mrf.mxu0
  %v631 = vadd.f32 0.0, %v630
  %v632 = vpop.f32.mrf.mxu0
  %v633 = vadd.f32 0.0, %v632
  %v634 = vpop.f32.mrf.mxu0
  %v635 = vpop.f32.mrf.mxu0
  %636 = vdwg.mxu0
  %v637 = vadd.f32 %v550, %v590
  %v638 = vadd.f32 %v551, %v592
  %v639 = vadd.f32 %v552, %v631
  %v640 = vadd.f32 %v553, %v633
  %v641 = vmul.f32 %v637, 0.5
  %v642 = vmul.f32 %v638, 0.5
  %v643 = vmul.f32 %v639, 0.5
  %v644 = vtanh.pop %v641
  %v645 = vtanh.pop %v642
  %v646 = vtanh.pop %v643
  %v647 = vadd.f32 %v644, 1.0
  %v648 = vadd.f32 %v645, 1.0
  %v649 = vadd.f32 %v646, 1.0
  %v650 = vmul.f32 %v647, 0.5
  %v651 = vmul.f32 %v648, 0.5
  %v652 = vmul.f32 %v649, 0.5
  %v653 = vtanh.pop %v640
  %v654 = vmul.f32 %v651, %v544
  %v655 = vmul.f32 %v650, %v653
  %v656 = vadd.f32 %v654, %v655
  %v657 = vtanh.pop %v656
  %v658 = vmul.f32 %v652, %v657
  %s659 = scalar_lea.vmem %s2, 24
  %660 = vst [vmem:[%s659] sm:$0xff] %v658
  %s661 = scalar_lea.vmem %s0, 128
  %v662 = vld [vmem:[%s661] sm:$0xff]
  %v663 = vld [vmem:[%s661 + $0x8] sm:$0xff]
  %v664 = vld [vmem:[%s661 + $0x10] sm:$0xff]
  %v665 = vld [vmem:[%s661 + $0x18] sm:$0xff]
  %v666 = vpack.c.bf16 %v658, %v658
  %667 = vmatprep.subr.bf16.mxu0 %v185
  %668 = vmatpush1.bf16.msra.mxu0 %v184
  %669 = vmatprep.subr.bf16.mxu0 %v181
  %670 = vmatpush1.bf16.msra.mxu0 %v180
  %671 = vmatprep.subr.bf16.mxu0 %v177
  %672 = vmatpush1.bf16.msra.mxu0 %v176
  %673 = vmatprep.subr.bf16.mxu0 %v173
  %674 = vmatpush1.bf16.msra.mxu0 %v172
  %675 = vmatprep.subr.bf16.mxu0 %v169
  %676 = vmatpush1.bf16.msra.mxu0 %v168
  %677 = vmatprep.subr.bf16.mxu0 %v165
  %678 = vmatpush1.bf16.msra.mxu0 %v164
  %679 = vmatprep.subr.bf16.mxu0 %v161
  %680 = vmatpush1.bf16.msra.mxu0 %v160
  %681 = vmatprep.subr.bf16.mxu0 %v157
  %682 = vmatpush1.bf16.msra.mxu0 %v156
  %683 = vmatprep.subr.bf16.mxu0 0
  %684 = vmatpush2.bf16.msra.mxu0 0
  %685 = vmatprep.subr.bf16.mxu0 0
  %686 = vmatpush2.bf16.msra.mxu0 0
  %687 = vmatprep.subr.bf16.mxu0 0
  %688 = vmatpush2.bf16.msra.mxu0 0
  %689 = vmatprep.subr.bf16.mxu0 0
  %690 = vmatpush2.bf16.msra.mxu0 0
  %691 = vmatprep.subr.bf16.mxu0 0
  %692 = vmatpush2.bf16.msra.mxu0 0
  %693 = vmatprep.subr.bf16.mxu0 0
  %694 = vmatpush2.bf16.msra.mxu0 0
  %695 = vmatprep.subr.bf16.mxu0 0
  %696 = vmatpush2.bf16.msra.mxu0 0
  %697 = vmatprep.subr.bf16.mxu0 0
  %698 = vmatpush2.bf16.msra.mxu0 0
  %699 = vmatprep.mubr.bf16.mxu0 0
  %700 = vmatmul.mubr.bf16.gmra.mxu0 %v666
  %v701 = vpop.f32.mrf.mxu0
  %v702 = vadd.f32 0.0, %v701
  %v703 = vpop.f32.mrf.mxu0
  %v704 = vadd.f32 0.0, %v703
  %v705 = vpop.f32.mrf.mxu0
  %v706 = vpop.f32.mrf.mxu0
  %707 = vdwg.mxu0
  %708 = vmatprep.subr.bf16.mxu0 %v187
  %709 = vmatpush1.bf16.msra.mxu0 %v186
  %710 = vmatprep.subr.bf16.mxu0 %v183
  %711 = vmatpush1.bf16.msra.mxu0 %v182
  %712 = vmatprep.subr.bf16.mxu0 %v179
  %713 = vmatpush1.bf16.msra.mxu0 %v178
  %714 = vmatprep.subr.bf16.mxu0 %v175
  %715 = vmatpush1.bf16.msra.mxu0 %v174
  %716 = vmatprep.subr.bf16.mxu0 %v171
  %717 = vmatpush1.bf16.msra.mxu0 %v170
  %718 = vmatprep.subr.bf16.mxu0 %v167
  %719 = vmatpush1.bf16.msra.mxu0 %v166
  %720 = vmatprep.subr.bf16.mxu0 %v163
  %721 = vmatpush1.bf16.msra.mxu0 %v162
  %722 = vmatprep.subr.bf16.mxu0 %v159
  %723 = vmatpush1.bf16.msra.mxu0 %v158
  %724 = vmatprep.subr.bf16.mxu0 0
  %725 = vmatpush2.bf16.msra.mxu0 0
  %726 = vmatprep.subr.bf16.mxu0 0
  %727 = vmatpush2.bf16.msra.mxu0 0
  %728 = vmatprep.subr.bf16.mxu0 0
  %729 = vmatpush2.bf16.msra.mxu0 0
  %730 = vmatprep.subr.bf16.mxu0 0
  %731 = vmatpush2.bf16.msra.mxu0 0
  %732 = vmatprep.subr.bf16.mxu0 0
  %733 = vmatpush2.bf16.msra.mxu0 0
  %734 = vmatprep.subr.bf16.mxu0 0
  %735 = vmatpush2.bf16.msra.mxu0 0
  %736 = vmatprep.subr.bf16.mxu0 0
  %737 = vmatpush2.bf16.msra.mxu0 0
  %738 = vmatprep.subr.bf16.mxu0 0
  %739 = vmatpush2.bf16.msra.mxu0 0
  %740 = vmatprep.mubr.bf16.mxu0 0
  %741 = vmatmul.mubr.bf16.gmra.mxu0 %v666
  %v742 = vpop.f32.mrf.mxu0
  %v743 = vadd.f32 0.0, %v742
  %v744 = vpop.f32.mrf.mxu0
  %v745 = vadd.f32 0.0, %v744
  %v746 = vpop.f32.mrf.mxu0
  %v747 = vpop.f32.mrf.mxu0
  %748 = vdwg.mxu0
  %v749 = vadd.f32 %v662, %v702
  %v750 = vadd.f32 %v663, %v704
  %v751 = vadd.f32 %v664, %v743
  %v752 = vadd.f32 %v665, %v745
  %v753 = vmul.f32 %v749, 0.5
  %v754 = vmul.f32 %v750, 0.5
  %v755 = vmul.f32 %v751, 0.5
  %v756 = vtanh.pop %v753
  %v757 = vtanh.pop %v754
  %v758 = vtanh.pop %v755
  %v759 = vadd.f32 %v756, 1.0
  %v760 = vadd.f32 %v757, 1.0
  %v761 = vadd.f32 %v758, 1.0
  %v762 = vmul.f32 %v759, 0.5
  %v763 = vmul.f32 %v760, 0.5
  %v764 = vmul.f32 %v761, 0.5
  %v765 = vtanh.pop %v752
  %v766 = vmul.f32 %v763, %v656
  %v767 = vmul.f32 %v762, %v765
  %v768 = vadd.f32 %v766, %v767
  %v769 = vtanh.pop %v768
  %v770 = vmul.f32 %v764, %v769
  %s771 = scalar_lea.vmem %s2, 32
  %772 = vst [vmem:[%s771] sm:$0xff] %v770
  %s773 = scalar_lea.vmem %s0, 160
  %v774 = vld [vmem:[%s773] sm:$0xff]
  %v775 = vld [vmem:[%s773 + $0x8] sm:$0xff]
  %v776 = vld [vmem:[%s773 + $0x10] sm:$0xff]
  %v777 = vld [vmem:[%s773 + $0x18] sm:$0xff]
  %v778 = vpack.c.bf16 %v770, %v770
  %779 = vmatprep.subr.bf16.mxu0 %v185
  %780 = vmatpush1.bf16.msra.mxu0 %v184
  %781 = vmatprep.subr.bf16.mxu0 %v181
  %782 = vmatpush1.bf16.msra.mxu0 %v180
  %783 = vmatprep.subr.bf16.mxu0 %v177
  %784 = vmatpush1.bf16.msra.mxu0 %v176
  %785 = vmatprep.subr.bf16.mxu0 %v173
  %786 = vmatpush1.bf16.msra.mxu0 %v172
  %787 = vmatprep.subr.bf16.mxu0 %v169
  %788 = vmatpush1.bf16.msra.mxu0 %v168
  %789 = vmatprep.subr.bf16.mxu0 %v165
  %790 = vmatpush1.bf16.msra.mxu0 %v164
  %791 = vmatprep.subr.bf16.mxu0 %v161
  %792 = vmatpush1.bf16.msra.mxu0 %v160
  %793 = vmatprep.subr.bf16.mxu0 %v157
  %794 = vmatpush1.bf16.msra.mxu0 %v156
  %795 = vmatprep.subr.bf16.mxu0 0
  %796 = vmatpush2.bf16.msra.mxu0 0
  %797 = vmatprep.subr.bf16.mxu0 0
  %798 = vmatpush2.bf16.msra.mxu0 0
  %799 = vmatprep.subr.bf16.mxu0 0
  %800 = vmatpush2.bf16.msra.mxu0 0
  %801 = vmatprep.subr.bf16.mxu0 0
  %802 = vmatpush2.bf16.msra.mxu0 0
  %803 = vmatprep.subr.bf16.mxu0 0
  %804 = vmatpush2.bf16.msra.mxu0 0
  %805 = vmatprep.subr.bf16.mxu0 0
  %806 = vmatpush2.bf16.msra.mxu0 0
  %807 = vmatprep.subr.bf16.mxu0 0
  %808 = vmatpush2.bf16.msra.mxu0 0
  %809 = vmatprep.subr.bf16.mxu0 0
  %810 = vmatpush2.bf16.msra.mxu0 0
  %811 = vmatprep.mubr.bf16.mxu0 0
  %812 = vmatmul.mubr.bf16.gmra.mxu0 %v778
  %v813 = vpop.f32.mrf.mxu0
  %v814 = vadd.f32 0.0, %v813
  %v815 = vpop.f32.mrf.mxu0
  %v816 = vadd.f32 0.0, %v815
  %v817 = vpop.f32.mrf.mxu0
  %v818 = vpop.f32.mrf.mxu0
  %819 = vdwg.mxu0
  %820 = vmatprep.subr.bf16.mxu0 %v187
  %821 = vmatpush1.bf16.msra.mxu0 %v186
  %822 = vmatprep.subr.bf16.mxu0 %v183
  %823 = vmatpush1.bf16.msra.mxu0 %v182
  %824 = vmatprep.subr.bf16.mxu0 %v179
  %825 = vmatpush1.bf16.msra.mxu0 %v178
  %826 = vmatprep.subr.bf16.mxu0 %v175
  %827 = vmatpush1.bf16.msra.mxu0 %v174
  %828 = vmatprep.subr.bf16.mxu0 %v171
  %829 = vmatpush1.bf16.msra.mxu0 %v170
  %830 = vmatprep.subr.bf16.mxu0 %v167
  %831 = vmatpush1.bf16.msra.mxu0 %v166
  %832 = vmatprep.subr.bf16.mxu0 %v163
  %833 = vmatpush1.bf16.msra.mxu0 %v162
  %834 = vmatprep.subr.bf16.mxu0 %v159
  %835 = vmatpush1.bf16.msra.mxu0 %v158
  %836 = vmatprep.subr.bf16.mxu0 0
  %837 = vmatpush2.bf16.msra.mxu0 0
  %838 = vmatprep.subr.bf16.mxu0 0
  %839 = vmatpush2.bf16.msra.mxu0 0
  %840 = vmatprep.subr.bf16.mxu0 0
  %841 = vmatpush2.bf16.msra.mxu0 0
  %842 = vmatprep.subr.bf16.mxu0 0
  %843 = vmatpush2.bf16.msra.mxu0 0
  %844 = vmatprep.subr.bf16.mxu0 0
  %845 = vmatpush2.bf16.msra.mxu0 0
  %846 = vmatprep.subr.bf16.mxu0 0
  %847 = vmatpush2.bf16.msra.mxu0 0
  %848 = vmatprep.subr.bf16.mxu0 0
  %849 = vmatpush2.bf16.msra.mxu0 0
  %850 = vmatprep.subr.bf16.mxu0 0
  %851 = vmatpush2.bf16.msra.mxu0 0
  %852 = vmatprep.mubr.bf16.mxu0 0
  %853 = vmatmul.mubr.bf16.gmra.mxu0 %v778
  %v854 = vpop.f32.mrf.mxu0
  %v855 = vadd.f32 0.0, %v854
  %v856 = vpop.f32.mrf.mxu0
  %v857 = vadd.f32 0.0, %v856
  %v858 = vpop.f32.mrf.mxu0
  %v859 = vpop.f32.mrf.mxu0
  %860 = vdwg.mxu0
  %v861 = vadd.f32 %v774, %v814
  %v862 = vadd.f32 %v775, %v816
  %v863 = vadd.f32 %v776, %v855
  %v864 = vadd.f32 %v777, %v857
  %v865 = vmul.f32 %v861, 0.5
  %v866 = vmul.f32 %v862, 0.5
  %v867 = vmul.f32 %v863, 0.5
  %v868 = vtanh.pop %v865
  %v869 = vtanh.pop %v866
  %v870 = vtanh.pop %v867
  %v871 = vadd.f32 %v868, 1.0
  %v872 = vadd.f32 %v869, 1.0
  %v873 = vadd.f32 %v870, 1.0
  %v874 = vmul.f32 %v871, 0.5
  %v875 = vmul.f32 %v872, 0.5
  %v876 = vmul.f32 %v873, 0.5
  %v877 = vtanh.pop %v864
  %v878 = vmul.f32 %v875, %v768
  %v879 = vmul.f32 %v874, %v877
  %v880 = vadd.f32 %v878, %v879
  %v881 = vtanh.pop %v880
  %v882 = vmul.f32 %v876, %v881
  %s883 = scalar_lea.vmem %s2, 40
  %884 = vst [vmem:[%s883] sm:$0xff] %v882
  %s885 = scalar_lea.vmem %s0, 192
  %v886 = vld [vmem:[%s885] sm:$0xff]
  %v887 = vld [vmem:[%s885 + $0x8] sm:$0xff]
  %v888 = vld [vmem:[%s885 + $0x10] sm:$0xff]
  %v889 = vld [vmem:[%s885 + $0x18] sm:$0xff]
  %v890 = vpack.c.bf16 %v882, %v882
  %891 = vmatprep.subr.bf16.mxu0 %v185
  %892 = vmatpush1.bf16.msra.mxu0 %v184
  %893 = vmatprep.subr.bf16.mxu0 %v181
  %894 = vmatpush1.bf16.msra.mxu0 %v180
  %895 = vmatprep.subr.bf16.mxu0 %v177
  %896 = vmatpush1.bf16.msra.mxu0 %v176
  %897 = vmatprep.subr.bf16.mxu0 %v173
  %898 = vmatpush1.bf16.msra.mxu0 %v172
  %899 = vmatprep.subr.bf16.mxu0 %v169
  %900 = vmatpush1.bf16.msra.mxu0 %v168
  %901 = vmatprep.subr.bf16.mxu0 %v165
  %902 = vmatpush1.bf16.msra.mxu0 %v164
  %903 = vmatprep.subr.bf16.mxu0 %v161
  %904 = vmatpush1.bf16.msra.mxu0 %v160
  %905 = vmatprep.subr.bf16.mxu0 %v157
  %906 = vmatpush1.bf16.msra.mxu0 %v156
  %907 = vmatprep.subr.bf16.mxu0 0
  %908 = vmatpush2.bf16.msra.mxu0 0
  %909 = vmatprep.subr.bf16.mxu0 0
  %910 = vmatpush2.bf16.msra.mxu0 0
  %911 = vmatprep.subr.bf16.mxu0 0
  %912 = vmatpush2.bf16.msra.mxu0 0
  %913 = vmatprep.subr.bf16.mxu0 0
  %914 = vmatpush2.bf16.msra.mxu0 0
  %915 = vmatprep.subr.bf16.mxu0 0
  %916 = vmatpush2.bf16.msra.mxu0 0
  %917 = vmatprep.subr.bf16.mxu0 0
  %918 = vmatpush2.bf16.msra.mxu0 0
  %919 = vmatprep.subr.bf16.mxu0 0
  %920 = vmatpush2.bf16.msra.mxu0 0
  %921 = vmatprep.subr.bf16.mxu0 0
  %922 = vmatpush2.bf16.msra.mxu0 0
  %923 = vmatprep.mubr.bf16.mxu0 0
  %924 = vmatmul.mubr.bf16.gmra.mxu0 %v890
  %v925 = vpop.f32.mrf.mxu0
  %v926 = vadd.f32 0.0, %v925
  %v927 = vpop.f32.mrf.mxu0
  %v928 = vadd.f32 0.0, %v927
  %v929 = vpop.f32.mrf.mxu0
  %v930 = vpop.f32.mrf.mxu0
  %931 = vdwg.mxu0
  %932 = vmatprep.subr.bf16.mxu0 %v187
  %933 = vmatpush1.bf16.msra.mxu0 %v186
  %934 = vmatprep.subr.bf16.mxu0 %v183
  %935 = vmatpush1.bf16.msra.mxu0 %v182
  %936 = vmatprep.subr.bf16.mxu0 %v179
  %937 = vmatpush1.bf16.msra.mxu0 %v178
  %938 = vmatprep.subr.bf16.mxu0 %v175
  %939 = vmatpush1.bf16.msra.mxu0 %v174
  %940 = vmatprep.subr.bf16.mxu0 %v171
  %941 = vmatpush1.bf16.msra.mxu0 %v170
  %942 = vmatprep.subr.bf16.mxu0 %v167
  %943 = vmatpush1.bf16.msra.mxu0 %v166
  %944 = vmatprep.subr.bf16.mxu0 %v163
  %945 = vmatpush1.bf16.msra.mxu0 %v162
  %946 = vmatprep.subr.bf16.mxu0 %v159
  %947 = vmatpush1.bf16.msra.mxu0 %v158
  %948 = vmatprep.subr.bf16.mxu0 0
  %949 = vmatpush2.bf16.msra.mxu0 0
  %950 = vmatprep.subr.bf16.mxu0 0
  %951 = vmatpush2.bf16.msra.mxu0 0
  %952 = vmatprep.subr.bf16.mxu0 0
  %953 = vmatpush2.bf16.msra.mxu0 0
  %954 = vmatprep.subr.bf16.mxu0 0
  %955 = vmatpush2.bf16.msra.mxu0 0
  %956 = vmatprep.subr.bf16.mxu0 0
  %957 = vmatpush2.bf16.msra.mxu0 0
  %958 = vmatprep.subr.bf16.mxu0 0
  %959 = vmatpush2.bf16.msra.mxu0 0
  %960 = vmatprep.subr.bf16.mxu0 0
  %961 = vmatpush2.bf16.msra.mxu0 0
  %962 = vmatprep.subr.bf16.mxu0 0
  %963 = vmatpush2.bf16.msra.mxu0 0
  %964 = vmatprep.mubr.bf16.mxu0 0
  %965 = vmatmul.mubr.bf16.gmra.mxu0 %v890
  %v966 = vpop.f32.mrf.mxu0
  %v967 = vadd.f32 0.0, %v966
  %v968 = vpop.f32.mrf.mxu0
  %v969 = vadd.f32 0.0, %v968
  %v970 = vpop.f32.mrf.mxu0
  %v971 = vpop.f32.mrf.mxu0
  %972 = vdwg.mxu0
  %v973 = vadd.f32 %v886, %v926
  %v974 = vadd.f32 %v887, %v928
  %v975 = vadd.f32 %v888, %v967
  %v976 = vadd.f32 %v889, %v969
  %v977 = vmul.f32 %v973, 0.5
  %v978 = vmul.f32 %v974, 0.5
  %v979 = vmul.f32 %v975, 0.5
  %v980 = vtanh.pop %v977
  %v981 = vtanh.pop %v978
  %v982 = vtanh.pop %v979
  %v983 = vadd.f32 %v980, 1.0
  %v984 = vadd.f32 %v981, 1.0
  %v985 = vadd.f32 %v982, 1.0
  %v986 = vmul.f32 %v983, 0.5
  %v987 = vmul.f32 %v984, 0.5
  %v988 = vmul.f32 %v985, 0.5
  %v989 = vtanh.pop %v976
  %v990 = vmul.f32 %v987, %v880
  %v991 = vmul.f32 %v986, %v989
  %v992 = vadd.f32 %v990, %v991
  %v993 = vtanh.pop %v992
  %v994 = vmul.f32 %v988, %v993
  %s995 = scalar_lea.vmem %s2, 48
  %996 = vst [vmem:[%s995] sm:$0xff] %v994
  %s997 = scalar_lea.vmem %s0, 224
  %v998 = vld [vmem:[%s997] sm:$0xff]
  %v999 = vld [vmem:[%s997 + $0x8] sm:$0xff]
  %v1000 = vld [vmem:[%s997 + $0x10] sm:$0xff]
  %v1001 = vld [vmem:[%s997 + $0x18] sm:$0xff]
  %v1002 = vpack.c.bf16 %v994, %v994
  %1003 = vmatprep.subr.bf16.mxu0 %v185
  %1004 = vmatpush1.bf16.msra.mxu0 %v184
  %1005 = vmatprep.subr.bf16.mxu0 %v181
  %1006 = vmatpush1.bf16.msra.mxu0 %v180
  %1007 = vmatprep.subr.bf16.mxu0 %v177
  %1008 = vmatpush1.bf16.msra.mxu0 %v176
  %1009 = vmatprep.subr.bf16.mxu0 %v173
  %1010 = vmatpush1.bf16.msra.mxu0 %v172
  %1011 = vmatprep.subr.bf16.mxu0 %v169
  %1012 = vmatpush1.bf16.msra.mxu0 %v168
  %1013 = vmatprep.subr.bf16.mxu0 %v165
  %1014 = vmatpush1.bf16.msra.mxu0 %v164
  %1015 = vmatprep.subr.bf16.mxu0 %v161
  %1016 = vmatpush1.bf16.msra.mxu0 %v160
  %1017 = vmatprep.subr.bf16.mxu0 %v157
  %1018 = vmatpush1.bf16.msra.mxu0 %v156
  %1019 = vmatprep.subr.bf16.mxu0 0
  %1020 = vmatpush2.bf16.msra.mxu0 0
  %1021 = vmatprep.subr.bf16.mxu0 0
  %1022 = vmatpush2.bf16.msra.mxu0 0
  %1023 = vmatprep.subr.bf16.mxu0 0
  %1024 = vmatpush2.bf16.msra.mxu0 0
  %1025 = vmatprep.subr.bf16.mxu0 0
  %1026 = vmatpush2.bf16.msra.mxu0 0
  %1027 = vmatprep.subr.bf16.mxu0 0
  %1028 = vmatpush2.bf16.msra.mxu0 0
  %1029 = vmatprep.subr.bf16.mxu0 0
  %1030 = vmatpush2.bf16.msra.mxu0 0
  %1031 = vmatprep.subr.bf16.mxu0 0
  %1032 = vmatpush2.bf16.msra.mxu0 0
  %1033 = vmatprep.subr.bf16.mxu0 0
  %1034 = vmatpush2.bf16.msra.mxu0 0
  %1035 = vmatprep.mubr.bf16.mxu0 0
  %1036 = vmatmul.mubr.bf16.gmra.mxu0 %v1002
  %v1037 = vpop.f32.mrf.mxu0
  %v1038 = vadd.f32 0.0, %v1037
  %v1039 = vpop.f32.mrf.mxu0
  %v1040 = vadd.f32 0.0, %v1039
  %v1041 = vpop.f32.mrf.mxu0
  %v1042 = vpop.f32.mrf.mxu0
  %1043 = vdwg.mxu0
  %1044 = vmatprep.subr.bf16.mxu0 %v187
  %1045 = vmatpush1.bf16.msra.mxu0 %v186
  %1046 = vmatprep.subr.bf16.mxu0 %v183
  %1047 = vmatpush1.bf16.msra.mxu0 %v182
  %1048 = vmatprep.subr.bf16.mxu0 %v179
  %1049 = vmatpush1.bf16.msra.mxu0 %v178
  %1050 = vmatprep.subr.bf16.mxu0 %v175
  %1051 = vmatpush1.bf16.msra.mxu0 %v174
  %1052 = vmatprep.subr.bf16.mxu0 %v171
  %1053 = vmatpush1.bf16.msra.mxu0 %v170
  %1054 = vmatprep.subr.bf16.mxu0 %v167
  %1055 = vmatpush1.bf16.msra.mxu0 %v166
  %1056 = vmatprep.subr.bf16.mxu0 %v163
  %1057 = vmatpush1.bf16.msra.mxu0 %v162
  %1058 = vmatprep.subr.bf16.mxu0 %v159
  %1059 = vmatpush1.bf16.msra.mxu0 %v158
  %1060 = vmatprep.subr.bf16.mxu0 0
  %1061 = vmatpush2.bf16.msra.mxu0 0
  %1062 = vmatprep.subr.bf16.mxu0 0
  %1063 = vmatpush2.bf16.msra.mxu0 0
  %1064 = vmatprep.subr.bf16.mxu0 0
  %1065 = vmatpush2.bf16.msra.mxu0 0
  %1066 = vmatprep.subr.bf16.mxu0 0
  %1067 = vmatpush2.bf16.msra.mxu0 0
  %1068 = vmatprep.subr.bf16.mxu0 0
  %1069 = vmatpush2.bf16.msra.mxu0 0
  %1070 = vmatprep.subr.bf16.mxu0 0
  %1071 = vmatpush2.bf16.msra.mxu0 0
  %1072 = vmatprep.subr.bf16.mxu0 0
  %1073 = vmatpush2.bf16.msra.mxu0 0
  %1074 = vmatprep.subr.bf16.mxu0 0
  %1075 = vmatpush2.bf16.msra.mxu0 0
  %1076 = vmatprep.mubr.bf16.mxu0 0
  %1077 = vmatmul.mubr.bf16.gmra.mxu0 %v1002
  %v1078 = vpop.f32.mrf.mxu0
  %v1079 = vadd.f32 0.0, %v1078
  %v1080 = vpop.f32.mrf.mxu0
  %v1081 = vadd.f32 0.0, %v1080
  %v1082 = vpop.f32.mrf.mxu0
  %v1083 = vpop.f32.mrf.mxu0
  %1084 = vdwg.mxu0
  %v1085 = vadd.f32 %v998, %v1038
  %v1086 = vadd.f32 %v999, %v1040
  %v1087 = vadd.f32 %v1000, %v1079
  %v1088 = vadd.f32 %v1001, %v1081
  %v1089 = vmul.f32 %v1085, 0.5
  %v1090 = vmul.f32 %v1086, 0.5
  %v1091 = vmul.f32 %v1087, 0.5
  %v1092 = vtanh.pop %v1089
  %v1093 = vtanh.pop %v1090
  %v1094 = vtanh.pop %v1091
  %v1095 = vadd.f32 %v1092, 1.0
  %v1096 = vadd.f32 %v1093, 1.0
  %v1097 = vadd.f32 %v1094, 1.0
  %v1098 = vmul.f32 %v1095, 0.5
  %v1099 = vmul.f32 %v1096, 0.5
  %v1100 = vmul.f32 %v1097, 0.5
  %v1101 = vtanh.pop %v1088
  %v1102 = vmul.f32 %v1099, %v992
  %v1103 = vmul.f32 %v1098, %v1101
  %v1104 = vadd.f32 %v1102, %v1103
  %v1105 = vtanh.pop %v1104
  %v1106 = vmul.f32 %v1100, %v1105
  %s1107 = scalar_lea.vmem %s2, 56
  %1108 = vst [vmem:[%s1107] sm:$0xff] %v1106
  %1109 = vst [vmem:[#allocation2] sm:$0xff] %v1106
  %1110 = vst [vmem:[#allocation3] sm:$0xff] %v1104
  %1111 = vst [vmem:[%s3] sm:$0xff] %v1106
  %1112 = vst [vmem:[%s4] sm:$0xff] %v1104
  // Predicated region
  $region14: #{lstm_encoder.1} parent=0 // pred_check
    _
  $region15: #{lstm_encoder.1} parent=0 // pred_check_branch
    %1114 = sbr.rel (0) target = $region17
  $region16: #{lstm_encoder.1} parent=0 // pred_region
    _
  $region17: #{lstm_encoder.1} parent=0 // pred_fallthru
    _
  // Predicated region
  $region18: #{lstm_encoder.1} parent=0 // pred_check
    _
  $region19: #{lstm_encoder.1} parent=0 // pred_check_branch
    %1116 = sbr.rel (0) target = $region21
  $region20: #{lstm_encoder.1} parent=0 // pred_region
    _
  $region21: #{lstm_encoder.1} parent=0 // pred_fallthru
    _
  // Predicated region
  $region22: #{lstm_encoder.1} parent=0 // pred_check
    _
  $region23: #{lstm_encoder.1} parent=0 // pred_check_branch
    %1118 = sbr.rel (0) target = $region25
  $region24: #{lstm_encoder.1} parent=0 // pred_region
    _
  $region25: #{lstm_encoder.1} parent=0 // pred_fallthru
    _
  // Predicated region
  $region26: #{lstm_encoder.1} parent=0 // pred_check
    _
  $region27: #{lstm_encoder.1} parent=0 // pred_check_branch
    %1120 = sbr.rel (0) target = $region29
  $region28: #{lstm_encoder.1} parent=0 // pred_region
    _
  $region29: #{lstm_encoder.1} parent=0 // pred_fallthru
    _
  // Predicated region
  $region30: #{lstm_encoder.1} parent=0 // pred_check
    _
  $region31: #{lstm_encoder.1} parent=0 // pred_check_branch
    %1122 = sbr.rel (0) target = $region33
  $region32: #{lstm_encoder.1} parent=0 // pred_region
    _
  $region33: #{lstm_encoder.1} parent=0 // pred_fallthru
    _
  // Predicated region
  $region34: #{lstm_encoder.1} parent=0 // pred_check
    _
  $region35: #{lstm_encoder.1} parent=0 // pred_check_branch
    %1124 = sbr.rel (0) target = $region37
  $region36: #{lstm_encoder.1} parent=0 // pred_region
    _
  $region37: #{lstm_encoder.1} parent=0 // pred_fallthru
    _

</llo_original>
